<compile_context>
chip_gen: v6e
topology: v6e:2x2x1
jax: 0.10.0
libtpu: 0.0.40
codegen_flags: <defaults>
</compile_context>

<pallas_src>
import jax
import jax.numpy as jnp
from jax import lax
from jax.experimental import pallas as pl
from jax.experimental.pallas import tpu as pltpu

NEG = -1e30  # Python float: baked into the jaxpr, NOT a captured constant.


def rnn_attn_kernel(emb_ref, len_col_ref, len_row_ref,
                    w_ih_ref, w_hh_ref, b_i_ref, b_hn_ref,
                    w_attn_in_ref, w_out_c_ref, w_out_q_ref,
                    w_lin_ref, b_lin_ref,
                    out_ref,
                    gi_ref, ctx_ref):
    T, Bp, E = emb_ref.shape
    Hp = ctx_ref.shape[2]

    # ---- Hoisted fused input projection: one (T*Bp,E) @ (E,3Hp) MXU matmul --
    emb_flat = emb_ref[...].reshape(T * Bp, E)                       # bf16
    gi = (jnp.dot(emb_flat, w_ih_ref[...],
                  preferred_element_type=jnp.float32)
          + b_i_ref[...])                                            # (T*Bp,3Hp) f32
    gi_ref[...] = gi.astype(jnp.bfloat16).reshape(T, Bp, 3 * Hp)     # bf16 scratch

    w_hh = w_hh_ref[...]                                             # (Hp,3Hp) bf16
    b_hn = b_hn_ref[...]                                             # (1,Hp) f32
    len_col = len_col_ref[...]                                       # (Bp,1) int32

    # ---- GRU recurrence: hidden carried in vregs, only ctx hits VMEM --------
    def step(t, h_prev):
        valid = len_col > t                                          # (Bp,1) bool
        h_bf = h_prev.astype(jnp.bfloat16)
        gh = jnp.dot(h_bf, w_hh, preferred_element_type=jnp.float32)  # (Bp,3Hp)
        gi_t = gi_ref[t].astype(jnp.float32)                          # (Bp,3Hp)
        r = jax.nn.sigmoid(gi_t[:, :Hp] + gh[:, :Hp])
        z = jax.nn.sigmoid(gi_t[:, Hp:2 * Hp] + gh[:, Hp:2 * Hp])
        n = jnp.tanh(gi_t[:, 2 * Hp:] + r * (gh[:, 2 * Hp:] + b_hn))
        h_new = (1.0 - z) * n + z * h_prev
        # packed-sequence semantics: frozen once past the sequence length
        h_t = jnp.where(valid, h_new, h_prev)
        ctx_ref[t] = jnp.where(valid, h_t, 0.0).astype(jnp.bfloat16)  # zero-padded
        return h_t

    unroll = True if T <= 16 else 4   # cap unroll: bounded vreg live ranges
    hidden = lax.fori_loop(0, T, step, jnp.zeros((Bp, Hp), jnp.float32),
                           unroll=unroll)                             # (Bp,Hp) f32

    # ---- Global (Luong) attention -------------------------------------------
    ctx = ctx_ref[...].astype(jnp.float32)                            # (T,Bp,Hp)
    hid_bf = hidden.astype(jnp.bfloat16)
    tgt = jnp.dot(hid_bf, w_attn_in_ref[...],
                  preferred_element_type=jnp.float32)                 # (Bp,Hp)

    # scores[t,b] = ctx[t,b,:] . tgt[b,:]  -- VPU multiply + lane reduce
    scores_tb = jnp.sum(ctx * tgt[None, :, :], axis=-1)               # (T,Bp)

    # length mask + softmax over time, time-major layout (no transposes)
    t_ids = lax.broadcasted_iota(jnp.int32, (T, Bp), 0)
    valid_tb = t_ids < len_row_ref[...]                               # (T,Bp)
    scores_tb = jnp.where(valid_tb, scores_tb, NEG)
    m = jnp.max(scores_tb, axis=0, keepdims=True)                     # (1,Bp)
    e = jnp.exp(scores_tb - m)
    denom = jnp.sum(e, axis=0, keepdims=True)                         # (1,Bp)
    attn_tb = e * pl.reciprocal(denom, approx=True)                   # (T,Bp)

    # weighted[b,h] = sum_t attn[t,b] * ctx[t,b,h]  -- VPU broadcast FMA over T
    weighted = jnp.sum(attn_tb[:, :, None] * ctx, axis=0)             # (Bp,Hp)

    # linear_out([weighted; hidden]) without the concat: two matmuls summed.
    h_tilde = jnp.tanh(
        jnp.dot(weighted.astype(jnp.bfloat16), w_out_c_ref[...],
                preferred_element_type=jnp.float32)
        + jnp.dot(hid_bf, w_out_q_ref[...],
                  preferred_element_type=jnp.float32))                # (Bp,Hp)

    # ---- classifier + log_softmax over the (lane-padded) class dim ----------
    # padded classes carry bias = -1e30 -> contribute exp(.) == 0 to the sum;
    # everything here stays f32 (do not move into bf16).
    logits = jnp.dot(h_tilde.astype(jnp.bfloat16), w_lin_ref[...],
                     preferred_element_type=jnp.float32) + b_lin_ref[...]
    logits = logits - jnp.max(logits, axis=-1, keepdims=True)
    out_ref[...] = logits - jnp.log(jnp.sum(jnp.exp(logits), axis=-1,
                                            keepdims=True))


def rnn_classification_attention(inputs, lengths, params, pad_idx):
    del pad_idx  # masks are derived from `lengths` (see header note)
    B, T = inputs.shape
    emb_table = params["embedding"]
    H = params["w_hh"].shape[0]
    C = params["w_lin"].shape[1]
    Bp = max(8, ((B + 7) // 8) * 8)            # sublane-pad the batch
    Hp = max(128, ((H + 127) // 128) * 128)    # lane-pad hidden (aligned gate slices)
    Cp = max(128, ((C + 127) // 128) * 128)    # lane-pad classifier output

    # nn.Embedding lookup kept as XLA glue (gather), then time-major + pad.
    emb = emb_table[inputs].astype(jnp.bfloat16)                  # (B,T,E)
    emb_tm = jnp.transpose(emb, (1, 0, 2))                        # (T,B,E)
    emb_tm = jnp.pad(emb_tm, ((0, 0), (0, Bp - B), (0, 0)))       # (T,Bp,E)

    len_pad = jnp.pad(lengths.astype(jnp.int32), (0, Bp - B))     # padded rows: len 0
    len_col = len_pad.reshape(Bp, 1)
    len_row = len_pad.reshape(1, Bp)

    # Per-gate (r,z,n) splits, zero-padded H->Hp, repacked as fused (.,3Hp).
    def pad_w(w):  # (X,H) -> (X,Hp)
        return jnp.pad(w, ((0, 0), (0, Hp - H)))

    w_ih_g = [pad_w(params["w_ih"][:, g * H:(g + 1) * H]) for g in range(3)]
    w_hh_g = [pad_w(params["w_hh"][:, g * H:(g + 1) * H]) for g in range(3)]
    b_ih_g = [pad_w(params["b_ih"][:, g * H:(g + 1) * H]) for g in range(3)]
    b_hh_g = [pad_w(params["b_hh"][:, g * H:(g + 1) * H]) for g in range(3)]

    w_ih_fused = jnp.concatenate(w_ih_g, axis=1).astype(jnp.bfloat16)       # (E,3Hp)
    w_hh_fused = jnp.pad(jnp.concatenate(w_hh_g, axis=1),
                         ((0, Hp - H), (0, 0))).astype(jnp.bfloat16)        # (Hp,3Hp)
    # Fold b_ih+b_hh for r,z into gi; the n-gate hidden bias stays inside r*(...)
    b_i_fused = jnp.concatenate([b_ih_g[0] + b_hh_g[0],
                                 b_ih_g[1] + b_hh_g[1],
                                 b_ih_g[2]], axis=1).astype(jnp.float32)    # (1,3Hp)
    b_hn = b_hh_g[2].astype(jnp.float32)                                    # (1,Hp)

    w_attn_in = jnp.pad(params["w_attn_in"],
                        ((0, Hp - H), (0, Hp - H))).astype(jnp.bfloat16)
    w_out_c = jnp.pad(params["w_attn_out"][:H],
                      ((0, Hp - H), (0, Hp - H))).astype(jnp.bfloat16)      # ctx half
    w_out_q = jnp.pad(params["w_attn_out"][H:],
                      ((0, Hp - H), (0, Hp - H))).astype(jnp.bfloat16)      # query half

    w_lin = jnp.pad(params["w_lin"],
                    ((0, Hp - H), (0, Cp - C))).astype(jnp.bfloat16)
    b_lin = jnp.pad(params["b_lin"], ((0, 0), (0, Cp - C)),
                    constant_values=NEG).astype(jnp.float32)

    out = pl.pallas_call(
        rnn_attn_kernel,
        out_shape=jax.ShapeDtypeStruct((Bp, Cp), jnp.float32),
        scratch_shapes=[
            pltpu.VMEM((T, Bp, 3 * Hp), jnp.bfloat16),   # fused gate pre-activations
            pltpu.VMEM((T, Bp, Hp), jnp.bfloat16),       # GRU context (time-major)
        ],
        compiler_params=pltpu.CompilerParams(
            vmem_limit_bytes=48 * 1024 * 1024),
    )(emb_tm, len_col, len_row,
      w_ih_fused, w_hh_fused, b_i_fused, b_hn,
      w_attn_in, w_out_c, w_out_q, w_lin, b_lin)

    return out[:B, :C]


def init_params(key, vocab_size, embedding_size, hidden_size, num_classes):
    ks = jax.random.split(key, 8)
    s = 0.1
    return {
        "embedding":  s * jax.random.normal(ks[0], (vocab_size, embedding_size), jnp.float32),
        "w_ih":       s * jax.random.normal(ks[1], (embedding_size, 3 * hidden_size), jnp.float32),
        "w_hh":       s * jax.random.normal(ks[2], (hidden_size, 3 * hidden_size), jnp.float32),
        "b_ih":       s * jax.random.normal(ks[3], (1, 3 * hidden_size), jnp.float32),
        "b_hh":       s * jax.random.normal(ks[4], (1, 3 * hidden_size), jnp.float32),
        # GlobalAttention(query_dim=H, context_dim=H): linear_in / linear_out (no bias)
        "w_attn_in":  s * jax.random.normal(ks[5], (hidden_size, hidden_size), jnp.float32),
        "w_attn_out": s * jax.random.normal(ks[6], (2 * hidden_size, hidden_size), jnp.float32),
        "w_lin":      s * jax.random.normal(ks[7], (hidden_size, num_classes), jnp.float32),
        "b_lin":      jnp.zeros((1, num_classes), jnp.float32),
    }


if __name__ == "__main__":
    vocab_size, embedding_size, hidden_size = 20, 16, 32
    num_classes, pad_idx = 5, 0
    B, T = 2, 8

    key = jax.random.PRNGKey(0)
    k_par, k_tok = jax.random.split(key)
    params = init_params(k_par, vocab_size, embedding_size, hidden_size, num_classes)

    lengths = jnp.array([8, 5], dtype=jnp.int32)
    tokens = jax.random.randint(k_tok, (B, T), 1, vocab_size, dtype=jnp.int32)
    pos = jnp.arange(T, dtype=jnp.int32)[None, :]
    inputs = jnp.where(pos < lengths[:, None], tokens, pad_idx)   # pad the tails

    out = rnn_classification_attention(inputs, lengths, params, pad_idx)
    out = jax.block_until_ready(out)

    # sanity: rows of exp(log_softmax) must sum to 1 and be finite
    row_sums = jnp.sum(jnp.exp(out), axis=-1)
    assert out.shape == (B, num_classes)
    assert bool(jnp.all(jnp.isfinite(out)))
    assert bool(jnp.allclose(row_sums, 1.0, atol=1e-3))
    print("KERNEL_OK")
</pallas_src>

<mosaic_0001>
module attributes {stable_mosaic.version = 11 : i64} {
  func.func @rnn_attn_kernel(%arg0: memref<8x8x16xbf16, #tpu.memory_space<vmem>>, %arg1: memref<8x1xi32, #tpu.memory_space<vmem>>, %arg2: memref<1x8xi32, #tpu.memory_space<vmem>>, %arg3: memref<16x384xbf16, #tpu.memory_space<vmem>>, %arg4: memref<128x384xbf16, #tpu.memory_space<vmem>>, %arg5: memref<1x384xf32, #tpu.memory_space<vmem>>, %arg6: memref<1x128xf32, #tpu.memory_space<vmem>>, %arg7: memref<128x128xbf16, #tpu.memory_space<vmem>>, %arg8: memref<128x128xbf16, #tpu.memory_space<vmem>>, %arg9: memref<128x128xbf16, #tpu.memory_space<vmem>>, %arg10: memref<128x128xbf16, #tpu.memory_space<vmem>>, %arg11: memref<1x128xf32, #tpu.memory_space<vmem>>, %arg12: memref<8x128xf32, #tpu.memory_space<vmem>>, %arg13: memref<8x8x384xbf16, #tpu.memory_space<vmem>>, %arg14: memref<8x8x128xbf16, #tpu.memory_space<vmem>>) attributes {dimension_semantics = [], scalar_prefetch = 0 : i64, scratch_operands = 2 : i64, tpu.core_type = #tpu.core_type<tc>} {
    %c0 = arith.constant 0 : index
    %c0_0 = arith.constant 0 : index
    %c0_1 = arith.constant 0 : index
    %0 = vector.load %arg0[%c0, %c0_0, %c0_1] : memref<8x8x16xbf16, #tpu.memory_space<vmem>>, vector<8x8x16xbf16>
    %1 = vector.shape_cast %0 : vector<8x8x16xbf16> to vector<64x16xbf16>
    %c0_2 = arith.constant 0 : index
    %c0_3 = arith.constant 0 : index
    %2 = vector.load %arg3[%c0_2, %c0_3] : memref<16x384xbf16, #tpu.memory_space<vmem>>, vector<16x384xbf16>
    %cst = arith.constant dense<0.000000e+00> : vector<64x384xf32>
    %3 = tpu.matmul %1, %2, %cst {dimension_numbers = #tpu.dot_dimension_numbers<[1], [0], [0], [1], [0, 0, 1, 1], [], []>} : vector<64x16xbf16>, vector<16x384xbf16>, vector<64x384xf32> -> vector<64x384xf32>
    %c0_4 = arith.constant 0 : index
    %c0_5 = arith.constant 0 : index
    %4 = vector.load %arg5[%c0_4, %c0_5] : memref<1x384xf32, #tpu.memory_space<vmem>>, vector<1x384xf32>
    %5 = vector.broadcast %4 : vector<1x384xf32> to vector<64x384xf32>
    %6 = arith.addf %3, %5 : vector<64x384xf32>
    %7 = arith.truncf %6 : vector<64x384xf32> to vector<64x384xbf16>
    %8 = vector.shape_cast %7 : vector<64x384xbf16> to vector<8x8x384xbf16>
    %c0_6 = arith.constant 0 : index
    %c0_7 = arith.constant 0 : index
    %c0_8 = arith.constant 0 : index
    %9 = vector.load %arg13[%c0_6, %c0_7, %c0_8] : memref<8x8x384xbf16, #tpu.memory_space<vmem>>, vector<8x8x384xbf16>
    tpu.vector_store %arg13[%c0_6, %c0_7, %c0_8], %8 {strides = array<i32>} : memref<8x8x384xbf16, #tpu.memory_space<vmem>>, vector<8x8x384xbf16>,
    %c0_9 = arith.constant 0 : index
    %c0_10 = arith.constant 0 : index
    %10 = vector.load %arg4[%c0_9, %c0_10] : memref<128x384xbf16, #tpu.memory_space<vmem>>, vector<128x384xbf16>
    %c0_11 = arith.constant 0 : index
    %c0_12 = arith.constant 0 : index
    %11 = vector.load %arg6[%c0_11, %c0_12] : memref<1x128xf32, #tpu.memory_space<vmem>>, vector<1x128xf32>
    %c0_13 = arith.constant 0 : index
    %c0_14 = arith.constant 0 : index
    %12 = vector.load %arg1[%c0_13, %c0_14] : memref<8x1xi32, #tpu.memory_space<vmem>>, vector<8x1xi32>
    %cst_15 = arith.constant 0.000000e+00 : f32
    %13 = vector.broadcast %cst_15 : f32 to vector<8x128xf32>
    %c0_i32 = arith.constant 0 : i32
    %14 = vector.broadcast %c0_i32 : i32 to vector<8x1xi32>
    %15 = arith.cmpi sgt, %12, %14 : vector<8x1xi32>
    %16 = arith.truncf %13 : vector<8x128xf32> to vector<8x128xbf16>
    %cst_16 = arith.constant dense<0.000000e+00> : vector<8x384xf32>
    %17 = tpu.matmul %16, %10, %cst_16 {dimension_numbers = #tpu.dot_dimension_numbers<[1], [0], [0], [1], [0, 0, 1, 1], [], []>} : vector<8x128xbf16>, vector<128x384xbf16>, vector<8x384xf32> -> vector<8x384xf32>
    %18 = arith.index_cast %c0_i32 : i32 to index
    %c0_17 = arith.constant 0 : index
    %c0_18 = arith.constant 0 : index
    %19 = vector.load %arg13[%18, %c0_17, %c0_18] : memref<8x8x384xbf16, #tpu.memory_space<vmem>>, vector<1x8x384xbf16>
    %20 = vector.shape_cast %19 : vector<1x8x384xbf16> to vector<8x384xbf16>
    %21 = arith.extf %20 : vector<8x384xbf16> to vector<8x384xf32>
    %22 = vector.extract_strided_slice %21 {offsets = [0, 0], sizes = [8, 128], strides = [1, 1]} : vector<8x384xf32> to vector<8x128xf32>
    %23 = vector.extract_strided_slice %17 {offsets = [0, 0], sizes = [8, 128], strides = [1, 1]} : vector<8x384xf32> to vector<8x128xf32>
    %24 = arith.addf %22, %23 : vector<8x128xf32>
    %25 = arith.negf %24 : vector<8x128xf32>
    %26 = math.exp %25 : vector<8x128xf32>
    %cst_19 = arith.constant 1.000000e+00 : f32
    %27 = vector.broadcast %cst_19 : f32 to vector<8x128xf32>
    %28 = arith.addf %27, %26 : vector<8x128xf32>
    %29 = arith.divf %27, %28 : vector<8x128xf32>
    %30 = vector.extract_strided_slice %21 {offsets = [0, 128], sizes = [8, 128], strides = [1, 1]} : vector<8x384xf32> to vector<8x128xf32>
    %31 = vector.extract_strided_slice %17 {offsets = [0, 128], sizes = [8, 128], strides = [1, 1]} : vector<8x384xf32> to vector<8x128xf32>
    %32 = arith.addf %30, %31 : vector<8x128xf32>
    %33 = arith.negf %32 : vector<8x128xf32>
    %34 = math.exp %33 : vector<8x128xf32>
    %cst_20 = arith.constant 1.000000e+00 : f32
    %35 = vector.broadcast %cst_20 : f32 to vector<8x128xf32>
    %36 = arith.addf %35, %34 : vector<8x128xf32>
    %37 = arith.divf %35, %36 : vector<8x128xf32>
    %38 = vector.extract_strided_slice %21 {offsets = [0, 256], sizes = [8, 128], strides = [1, 1]} : vector<8x384xf32> to vector<8x128xf32>
    %39 = vector.extract_strided_slice %17 {offsets = [0, 256], sizes = [8, 128], strides = [1, 1]} : vector<8x384xf32> to vector<8x128xf32>
    %40 = vector.broadcast %11 : vector<1x128xf32> to vector<8x128xf32>
    %41 = arith.addf %39, %40 : vector<8x128xf32>
    %42 = arith.mulf %29, %41 : vector<8x128xf32>
    %43 = arith.addf %38, %42 : vector<8x128xf32>
    %44 = math.tanh %43 : vector<8x128xf32>
    %cst_21 = arith.constant 1.000000e+00 : f32
    %45 = vector.broadcast %cst_21 : f32 to vector<8x128xf32>
    %46 = arith.subf %45, %37 : vector<8x128xf32>
    %47 = arith.mulf %46, %44 : vector<8x128xf32>
    %48 = arith.mulf %37, %13 : vector<8x128xf32>
    %49 = arith.addf %47, %48 : vector<8x128xf32>
    %50 = vector.shape_cast %15 : vector<8x1xi1> to vector<8x1xi1>
    %51 = vector.broadcast %50 : vector<8x1xi1> to vector<8x128xi1>
    %52 = arith.select %51, %49, %13 : vector<8x128xi1>, vector<8x128xf32>
    %cst_22 = arith.constant 0.000000e+00 : f32
    %53 = vector.shape_cast %15 : vector<8x1xi1> to vector<8x1xi1>
    %54 = vector.broadcast %53 : vector<8x1xi1> to vector<8x128xi1>
    %55 = vector.broadcast %cst_22 : f32 to vector<8x128xf32>
    %56 = arith.select %54, %52, %55 : vector<8x128xi1>, vector<8x128xf32>
    %57 = arith.truncf %56 : vector<8x128xf32> to vector<8x128xbf16>
    %58 = arith.index_cast %c0_i32 : i32 to index
    %c0_23 = arith.constant 0 : index
    %c0_24 = arith.constant 0 : index
    %59 = vector.load %arg14[%58, %c0_23, %c0_24] : memref<8x8x128xbf16, #tpu.memory_space<vmem>>, vector<1x8x128xbf16>
    %60 = vector.shape_cast %59 : vector<1x8x128xbf16> to vector<8x128xbf16>
    %61 = vector.shape_cast %57 : vector<8x128xbf16> to vector<1x8x128xbf16>
    tpu.vector_store %arg14[%58, %c0_23, %c0_24], %61 {strides = array<i32>} : memref<8x8x128xbf16, #tpu.memory_space<vmem>>, vector<1x8x128xbf16>,
    %c1_i32 = arith.constant 1 : i32
    %62 = vector.broadcast %c1_i32 : i32 to vector<8x1xi32>
    %63 = arith.cmpi sgt, %12, %62 : vector<8x1xi32>
    %64 = arith.truncf %52 : vector<8x128xf32> to vector<8x128xbf16>
    %cst_25 = arith.constant dense<0.000000e+00> : vector<8x384xf32>
    %65 = tpu.matmul %64, %10, %cst_25 {dimension_numbers = #tpu.dot_dimension_numbers<[1], [0], [0], [1], [0, 0, 1, 1], [], []>} : vector<8x128xbf16>, vector<128x384xbf16>, vector<8x384xf32> -> vector<8x384xf32>
    %66 = arith.index_cast %c1_i32 : i32 to index
    %c0_26 = arith.constant 0 : index
    %c0_27 = arith.constant 0 : index
    %67 = vector.load %arg13[%66, %c0_26, %c0_27] : memref<8x8x384xbf16, #tpu.memory_space<vmem>>, vector<1x8x384xbf16>
    %68 = vector.shape_cast %67 : vector<1x8x384xbf16> to vector<8x384xbf16>
    %69 = arith.extf %68 : vector<8x384xbf16> to vector<8x384xf32>
    %70 = vector.extract_strided_slice %69 {offsets = [0, 0], sizes = [8, 128], strides = [1, 1]} : vector<8x384xf32> to vector<8x128xf32>
    %71 = vector.extract_strided_slice %65 {offsets = [0, 0], sizes = [8, 128], strides = [1, 1]} : vector<8x384xf32> to vector<8x128xf32>
    %72 = arith.addf %70, %71 : vector<8x128xf32>
    %73 = arith.negf %72 : vector<8x128xf32>
    %74 = math.exp %73 : vector<8x128xf32>
    %cst_28 = arith.constant 1.000000e+00 : f32
    %75 = vector.broadcast %cst_28 : f32 to vector<8x128xf32>
    %76 = arith.addf %75, %74 : vector<8x128xf32>
    %77 = arith.divf %75, %76 : vector<8x128xf32>
    %78 = vector.extract_strided_slice %69 {offsets = [0, 128], sizes = [8, 128], strides = [1, 1]} : vector<8x384xf32> to vector<8x128xf32>
    %79 = vector.extract_strided_slice %65 {offsets = [0, 128], sizes = [8, 128], strides = [1, 1]} : vector<8x384xf32> to vector<8x128xf32>
    %80 = arith.addf %78, %79 : vector<8x128xf32>
    %81 = arith.negf %80 : vector<8x128xf32>
    %82 = math.exp %81 : vector<8x128xf32>
    %cst_29 = arith.constant 1.000000e+00 : f32
    %83 = vector.broadcast %cst_29 : f32 to vector<8x128xf32>
    %84 = arith.addf %83, %82 : vector<8x128xf32>
    %85 = arith.divf %83, %84 : vector<8x128xf32>
    %86 = vector.extract_strided_slice %69 {offsets = [0, 256], sizes = [8, 128], strides = [1, 1]} : vector<8x384xf32> to vector<8x128xf32>
    %87 = vector.extract_strided_slice %65 {offsets = [0, 256], sizes = [8, 128], strides = [1, 1]} : vector<8x384xf32> to vector<8x128xf32>
    %88 = vector.broadcast %11 : vector<1x128xf32> to vector<8x128xf32>
    %89 = arith.addf %87, %88 : vector<8x128xf32>
    %90 = arith.mulf %77, %89 : vector<8x128xf32>
    %91 = arith.addf %86, %90 : vector<8x128xf32>
    %92 = math.tanh %91 : vector<8x128xf32>
    %cst_30 = arith.constant 1.000000e+00 : f32
    %93 = vector.broadcast %cst_30 : f32 to vector<8x128xf32>
    %94 = arith.subf %93, %85 : vector<8x128xf32>
    %95 = arith.mulf %94, %92 : vector<8x128xf32>
    %96 = arith.mulf %85, %52 : vector<8x128xf32>
    %97 = arith.addf %95, %96 : vector<8x128xf32>
    %98 = vector.shape_cast %63 : vector<8x1xi1> to vector<8x1xi1>
    %99 = vector.broadcast %98 : vector<8x1xi1> to vector<8x128xi1>
    %100 = arith.select %99, %97, %52 : vector<8x128xi1>, vector<8x128xf32>
    %cst_31 = arith.constant 0.000000e+00 : f32
    %101 = vector.shape_cast %63 : vector<8x1xi1> to vector<8x1xi1>
    %102 = vector.broadcast %101 : vector<8x1xi1> to vector<8x128xi1>
    %103 = vector.broadcast %cst_31 : f32 to vector<8x128xf32>
    %104 = arith.select %102, %100, %103 : vector<8x128xi1>, vector<8x128xf32>
    %105 = arith.truncf %104 : vector<8x128xf32> to vector<8x128xbf16>
    %106 = arith.index_cast %c1_i32 : i32 to index
    %c0_32 = arith.constant 0 : index
    %c0_33 = arith.constant 0 : index
    %107 = vector.load %arg14[%106, %c0_32, %c0_33] : memref<8x8x128xbf16, #tpu.memory_space<vmem>>, vector<1x8x128xbf16>
    %108 = vector.shape_cast %107 : vector<1x8x128xbf16> to vector<8x128xbf16>
    %109 = vector.shape_cast %105 : vector<8x128xbf16> to vector<1x8x128xbf16>
    tpu.vector_store %arg14[%106, %c0_32, %c0_33], %109 {strides = array<i32>} : memref<8x8x128xbf16, #tpu.memory_space<vmem>>, vector<1x8x128xbf16>,
    %c2_i32 = arith.constant 2 : i32
    %110 = vector.broadcast %c2_i32 : i32 to vector<8x1xi32>
    %111 = arith.cmpi sgt, %12, %110 : vector<8x1xi32>
    %112 = arith.truncf %100 : vector<8x128xf32> to vector<8x128xbf16>
    %cst_34 = arith.constant dense<0.000000e+00> : vector<8x384xf32>
    %113 = tpu.matmul %112, %10, %cst_34 {dimension_numbers = #tpu.dot_dimension_numbers<[1], [0], [0], [1], [0, 0, 1, 1], [], []>} : vector<8x128xbf16>, vector<128x384xbf16>, vector<8x384xf32> -> vector<8x384xf32>
    %114 = arith.index_cast %c2_i32 : i32 to index
    %c0_35 = arith.constant 0 : index
    %c0_36 = arith.constant 0 : index
    %115 = vector.load %arg13[%114, %c0_35, %c0_36] : memref<8x8x384xbf16, #tpu.memory_space<vmem>>, vector<1x8x384xbf16>
    %116 = vector.shape_cast %115 : vector<1x8x384xbf16> to vector<8x384xbf16>
    %117 = arith.extf %116 : vector<8x384xbf16> to vector<8x384xf32>
    %118 = vector.extract_strided_slice %117 {offsets = [0, 0], sizes = [8, 128], strides = [1, 1]} : vector<8x384xf32> to vector<8x128xf32>
    %119 = vector.extract_strided_slice %113 {offsets = [0, 0], sizes = [8, 128], strides = [1, 1]} : vector<8x384xf32> to vector<8x128xf32>
    %120 = arith.addf %118, %119 : vector<8x128xf32>
    %121 = arith.negf %120 : vector<8x128xf32>
    %122 = math.exp %121 : vector<8x128xf32>
    %cst_37 = arith.constant 1.000000e+00 : f32
    %123 = vector.broadcast %cst_37 : f32 to vector<8x128xf32>
    %124 = arith.addf %123, %122 : vector<8x128xf32>
    %125 = arith.divf %123, %124 : vector<8x128xf32>
    %126 = vector.extract_strided_slice %117 {offsets = [0, 128], sizes = [8, 128], strides = [1, 1]} : vector<8x384xf32> to vector<8x128xf32>
    %127 = vector.extract_strided_slice %113 {offsets = [0, 128], sizes = [8, 128], strides = [1, 1]} : vector<8x384xf32> to vector<8x128xf32>
    %128 = arith.addf %126, %127 : vector<8x128xf32>
    %129 = arith.negf %128 : vector<8x128xf32>
    %130 = math.exp %129 : vector<8x128xf32>
    %cst_38 = arith.constant 1.000000e+00 : f32
    %131 = vector.broadcast %cst_38 : f32 to vector<8x128xf32>
    %132 = arith.addf %131, %130 : vector<8x128xf32>
    %133 = arith.divf %131, %132 : vector<8x128xf32>
    %134 = vector.extract_strided_slice %117 {offsets = [0, 256], sizes = [8, 128], strides = [1, 1]} : vector<8x384xf32> to vector<8x128xf32>
    %135 = vector.extract_strided_slice %113 {offsets = [0, 256], sizes = [8, 128], strides = [1, 1]} : vector<8x384xf32> to vector<8x128xf32>
    %136 = vector.broadcast %11 : vector<1x128xf32> to vector<8x128xf32>
    %137 = arith.addf %135, %136 : vector<8x128xf32>
    %138 = arith.mulf %125, %137 : vector<8x128xf32>
    %139 = arith.addf %134, %138 : vector<8x128xf32>
    %140 = math.tanh %139 : vector<8x128xf32>
    %cst_39 = arith.constant 1.000000e+00 : f32
    %141 = vector.broadcast %cst_39 : f32 to vector<8x128xf32>
    %142 = arith.subf %141, %133 : vector<8x128xf32>
    %143 = arith.mulf %142, %140 : vector<8x128xf32>
    %144 = arith.mulf %133, %100 : vector<8x128xf32>
    %145 = arith.addf %143, %144 : vector<8x128xf32>
    %146 = vector.shape_cast %111 : vector<8x1xi1> to vector<8x1xi1>
    %147 = vector.broadcast %146 : vector<8x1xi1> to vector<8x128xi1>
    %148 = arith.select %147, %145, %100 : vector<8x128xi1>, vector<8x128xf32>
    %cst_40 = arith.constant 0.000000e+00 : f32
    %149 = vector.shape_cast %111 : vector<8x1xi1> to vector<8x1xi1>
    %150 = vector.broadcast %149 : vector<8x1xi1> to vector<8x128xi1>
    %151 = vector.broadcast %cst_40 : f32 to vector<8x128xf32>
    %152 = arith.select %150, %148, %151 : vector<8x128xi1>, vector<8x128xf32>
    %153 = arith.truncf %152 : vector<8x128xf32> to vector<8x128xbf16>
    %154 = arith.index_cast %c2_i32 : i32 to index
    %c0_41 = arith.constant 0 : index
    %c0_42 = arith.constant 0 : index
    %155 = vector.load %arg14[%154, %c0_41, %c0_42] : memref<8x8x128xbf16, #tpu.memory_space<vmem>>, vector<1x8x128xbf16>
    %156 = vector.shape_cast %155 : vector<1x8x128xbf16> to vector<8x128xbf16>
    %157 = vector.shape_cast %153 : vector<8x128xbf16> to vector<1x8x128xbf16>
    tpu.vector_store %arg14[%154, %c0_41, %c0_42], %157 {strides = array<i32>} : memref<8x8x128xbf16, #tpu.memory_space<vmem>>, vector<1x8x128xbf16>,
    %c3_i32 = arith.constant 3 : i32
    %158 = vector.broadcast %c3_i32 : i32 to vector<8x1xi32>
    %159 = arith.cmpi sgt, %12, %158 : vector<8x1xi32>
    %160 = arith.truncf %148 : vector<8x128xf32> to vector<8x128xbf16>
    %cst_43 = arith.constant dense<0.000000e+00> : vector<8x384xf32>
    %161 = tpu.matmul %160, %10, %cst_43 {dimension_numbers = #tpu.dot_dimension_numbers<[1], [0], [0], [1], [0, 0, 1, 1], [], []>} : vector<8x128xbf16>, vector<128x384xbf16>, vector<8x384xf32> -> vector<8x384xf32>
    %162 = arith.index_cast %c3_i32 : i32 to index
    %c0_44 = arith.constant 0 : index
    %c0_45 = arith.constant 0 : index
    %163 = vector.load %arg13[%162, %c0_44, %c0_45] : memref<8x8x384xbf16, #tpu.memory_space<vmem>>, vector<1x8x384xbf16>
    %164 = vector.shape_cast %163 : vector<1x8x384xbf16> to vector<8x384xbf16>
    %165 = arith.extf %164 : vector<8x384xbf16> to vector<8x384xf32>
    %166 = vector.extract_strided_slice %165 {offsets = [0, 0], sizes = [8, 128], strides = [1, 1]} : vector<8x384xf32> to vector<8x128xf32>
    %167 = vector.extract_strided_slice %161 {offsets = [0, 0], sizes = [8, 128], strides = [1, 1]} : vector<8x384xf32> to vector<8x128xf32>
    %168 = arith.addf %166, %167 : vector<8x128xf32>
    %169 = arith.negf %168 : vector<8x128xf32>
    %170 = math.exp %169 : vector<8x128xf32>
    %cst_46 = arith.constant 1.000000e+00 : f32
    %171 = vector.broadcast %cst_46 : f32 to vector<8x128xf32>
    %172 = arith.addf %171, %170 : vector<8x128xf32>
    %173 = arith.divf %171, %172 : vector<8x128xf32>
    %174 = vector.extract_strided_slice %165 {offsets = [0, 128], sizes = [8, 128], strides = [1, 1]} : vector<8x384xf32> to vector<8x128xf32>
    %175 = vector.extract_strided_slice %161 {offsets = [0, 128], sizes = [8, 128], strides = [1, 1]} : vector<8x384xf32> to vector<8x128xf32>
    %176 = arith.addf %174, %175 : vector<8x128xf32>
    %177 = arith.negf %176 : vector<8x128xf32>
    %178 = math.exp %177 : vector<8x128xf32>
    %cst_47 = arith.constant 1.000000e+00 : f32
    %179 = vector.broadcast %cst_47 : f32 to vector<8x128xf32>
    %180 = arith.addf %179, %178 : vector<8x128xf32>
    %181 = arith.divf %179, %180 : vector<8x128xf32>
    %182 = vector.extract_strided_slice %165 {offsets = [0, 256], sizes = [8, 128], strides = [1, 1]} : vector<8x384xf32> to vector<8x128xf32>
    %183 = vector.extract_strided_slice %161 {offsets = [0, 256], sizes = [8, 128], strides = [1, 1]} : vector<8x384xf32> to vector<8x128xf32>
    %184 = vector.broadcast %11 : vector<1x128xf32> to vector<8x128xf32>
    %185 = arith.addf %183, %184 : vector<8x128xf32>
    %186 = arith.mulf %173, %185 : vector<8x128xf32>
    %187 = arith.addf %182, %186 : vector<8x128xf32>
    %188 = math.tanh %187 : vector<8x128xf32>
    %cst_48 = arith.constant 1.000000e+00 : f32
    %189 = vector.broadcast %cst_48 : f32 to vector<8x128xf32>
    %190 = arith.subf %189, %181 : vector<8x128xf32>
    %191 = arith.mulf %190, %188 : vector<8x128xf32>
    %192 = arith.mulf %181, %148 : vector<8x128xf32>
    %193 = arith.addf %191, %192 : vector<8x128xf32>
    %194 = vector.shape_cast %159 : vector<8x1xi1> to vector<8x1xi1>
    %195 = vector.broadcast %194 : vector<8x1xi1> to vector<8x128xi1>
    %196 = arith.select %195, %193, %148 : vector<8x128xi1>, vector<8x128xf32>
    %cst_49 = arith.constant 0.000000e+00 : f32
    %197 = vector.shape_cast %159 : vector<8x1xi1> to vector<8x1xi1>
    %198 = vector.broadcast %197 : vector<8x1xi1> to vector<8x128xi1>
    %199 = vector.broadcast %cst_49 : f32 to vector<8x128xf32>
    %200 = arith.select %198, %196, %199 : vector<8x128xi1>, vector<8x128xf32>
    %201 = arith.truncf %200 : vector<8x128xf32> to vector<8x128xbf16>
    %202 = arith.index_cast %c3_i32 : i32 to index
    %c0_50 = arith.constant 0 : index
    %c0_51 = arith.constant 0 : index
    %203 = vector.load %arg14[%202, %c0_50, %c0_51] : memref<8x8x128xbf16, #tpu.memory_space<vmem>>, vector<1x8x128xbf16>
    %204 = vector.shape_cast %203 : vector<1x8x128xbf16> to vector<8x128xbf16>
    %205 = vector.shape_cast %201 : vector<8x128xbf16> to vector<1x8x128xbf16>
    tpu.vector_store %arg14[%202, %c0_50, %c0_51], %205 {strides = array<i32>} : memref<8x8x128xbf16, #tpu.memory_space<vmem>>, vector<1x8x128xbf16>,
    %c4_i32 = arith.constant 4 : i32
    %206 = vector.broadcast %c4_i32 : i32 to vector<8x1xi32>
    %207 = arith.cmpi sgt, %12, %206 : vector<8x1xi32>
    %208 = arith.truncf %196 : vector<8x128xf32> to vector<8x128xbf16>
    %cst_52 = arith.constant dense<0.000000e+00> : vector<8x384xf32>
    %209 = tpu.matmul %208, %10, %cst_52 {dimension_numbers = #tpu.dot_dimension_numbers<[1], [0], [0], [1], [0, 0, 1, 1], [], []>} : vector<8x128xbf16>, vector<128x384xbf16>, vector<8x384xf32> -> vector<8x384xf32>
    %210 = arith.index_cast %c4_i32 : i32 to index
    %c0_53 = arith.constant 0 : index
    %c0_54 = arith.constant 0 : index
    %211 = vector.load %arg13[%210, %c0_53, %c0_54] : memref<8x8x384xbf16, #tpu.memory_space<vmem>>, vector<1x8x384xbf16>
    %212 = vector.shape_cast %211 : vector<1x8x384xbf16> to vector<8x384xbf16>
    %213 = arith.extf %212 : vector<8x384xbf16> to vector<8x384xf32>
    %214 = vector.extract_strided_slice %213 {offsets = [0, 0], sizes = [8, 128], strides = [1, 1]} : vector<8x384xf32> to vector<8x128xf32>
    %215 = vector.extract_strided_slice %209 {offsets = [0, 0], sizes = [8, 128], strides = [1, 1]} : vector<8x384xf32> to vector<8x128xf32>
    %216 = arith.addf %214, %215 : vector<8x128xf32>
    %217 = arith.negf %216 : vector<8x128xf32>
    %218 = math.exp %217 : vector<8x128xf32>
    %cst_55 = arith.constant 1.000000e+00 : f32
    %219 = vector.broadcast %cst_55 : f32 to vector<8x128xf32>
    %220 = arith.addf %219, %218 : vector<8x128xf32>
    %221 = arith.divf %219, %220 : vector<8x128xf32>
    %222 = vector.extract_strided_slice %213 {offsets = [0, 128], sizes = [8, 128], strides = [1, 1]} : vector<8x384xf32> to vector<8x128xf32>
    %223 = vector.extract_strided_slice %209 {offsets = [0, 128], sizes = [8, 128], strides = [1, 1]} : vector<8x384xf32> to vector<8x128xf32>
    %224 = arith.addf %222, %223 : vector<8x128xf32>
    %225 = arith.negf %224 : vector<8x128xf32>
    %226 = math.exp %225 : vector<8x128xf32>
    %cst_56 = arith.constant 1.000000e+00 : f32
    %227 = vector.broadcast %cst_56 : f32 to vector<8x128xf32>
    %228 = arith.addf %227, %226 : vector<8x128xf32>
    %229 = arith.divf %227, %228 : vector<8x128xf32>
    %230 = vector.extract_strided_slice %213 {offsets = [0, 256], sizes = [8, 128], strides = [1, 1]} : vector<8x384xf32> to vector<8x128xf32>
    %231 = vector.extract_strided_slice %209 {offsets = [0, 256], sizes = [8, 128], strides = [1, 1]} : vector<8x384xf32> to vector<8x128xf32>
    %232 = vector.broadcast %11 : vector<1x128xf32> to vector<8x128xf32>
    %233 = arith.addf %231, %232 : vector<8x128xf32>
    %234 = arith.mulf %221, %233 : vector<8x128xf32>
    %235 = arith.addf %230, %234 : vector<8x128xf32>
    %236 = math.tanh %235 : vector<8x128xf32>
    %cst_57 = arith.constant 1.000000e+00 : f32
    %237 = vector.broadcast %cst_57 : f32 to vector<8x128xf32>
    %238 = arith.subf %237, %229 : vector<8x128xf32>
    %239 = arith.mulf %238, %236 : vector<8x128xf32>
    %240 = arith.mulf %229, %196 : vector<8x128xf32>
    %241 = arith.addf %239, %240 : vector<8x128xf32>
    %242 = vector.shape_cast %207 : vector<8x1xi1> to vector<8x1xi1>
    %243 = vector.broadcast %242 : vector<8x1xi1> to vector<8x128xi1>
    %244 = arith.select %243, %241, %196 : vector<8x128xi1>, vector<8x128xf32>
    %cst_58 = arith.constant 0.000000e+00 : f32
    %245 = vector.shape_cast %207 : vector<8x1xi1> to vector<8x1xi1>
    %246 = vector.broadcast %245 : vector<8x1xi1> to vector<8x128xi1>
    %247 = vector.broadcast %cst_58 : f32 to vector<8x128xf32>
    %248 = arith.select %246, %244, %247 : vector<8x128xi1>, vector<8x128xf32>
    %249 = arith.truncf %248 : vector<8x128xf32> to vector<8x128xbf16>
    %250 = arith.index_cast %c4_i32 : i32 to index
    %c0_59 = arith.constant 0 : index
    %c0_60 = arith.constant 0 : index
    %251 = vector.load %arg14[%250, %c0_59, %c0_60] : memref<8x8x128xbf16, #tpu.memory_space<vmem>>, vector<1x8x128xbf16>
    %252 = vector.shape_cast %251 : vector<1x8x128xbf16> to vector<8x128xbf16>
    %253 = vector.shape_cast %249 : vector<8x128xbf16> to vector<1x8x128xbf16>
    tpu.vector_store %arg14[%250, %c0_59, %c0_60], %253 {strides = array<i32>} : memref<8x8x128xbf16, #tpu.memory_space<vmem>>, vector<1x8x128xbf16>,
    %c5_i32 = arith.constant 5 : i32
    %254 = vector.broadcast %c5_i32 : i32 to vector<8x1xi32>
    %255 = arith.cmpi sgt, %12, %254 : vector<8x1xi32>
    %256 = arith.truncf %244 : vector<8x128xf32> to vector<8x128xbf16>
    %cst_61 = arith.constant dense<0.000000e+00> : vector<8x384xf32>
    %257 = tpu.matmul %256, %10, %cst_61 {dimension_numbers = #tpu.dot_dimension_numbers<[1], [0], [0], [1], [0, 0, 1, 1], [], []>} : vector<8x128xbf16>, vector<128x384xbf16>, vector<8x384xf32> -> vector<8x384xf32>
    %258 = arith.index_cast %c5_i32 : i32 to index
    %c0_62 = arith.constant 0 : index
    %c0_63 = arith.constant 0 : index
    %259 = vector.load %arg13[%258, %c0_62, %c0_63] : memref<8x8x384xbf16, #tpu.memory_space<vmem>>, vector<1x8x384xbf16>
    %260 = vector.shape_cast %259 : vector<1x8x384xbf16> to vector<8x384xbf16>
    %261 = arith.extf %260 : vector<8x384xbf16> to vector<8x384xf32>
    %262 = vector.extract_strided_slice %261 {offsets = [0, 0], sizes = [8, 128], strides = [1, 1]} : vector<8x384xf32> to vector<8x128xf32>
    %263 = vector.extract_strided_slice %257 {offsets = [0, 0], sizes = [8, 128], strides = [1, 1]} : vector<8x384xf32> to vector<8x128xf32>
    %264 = arith.addf %262, %263 : vector<8x128xf32>
    %265 = arith.negf %264 : vector<8x128xf32>
    %266 = math.exp %265 : vector<8x128xf32>
    %cst_64 = arith.constant 1.000000e+00 : f32
    %267 = vector.broadcast %cst_64 : f32 to vector<8x128xf32>
    %268 = arith.addf %267, %266 : vector<8x128xf32>
    %269 = arith.divf %267, %268 : vector<8x128xf32>
    %270 = vector.extract_strided_slice %261 {offsets = [0, 128], sizes = [8, 128], strides = [1, 1]} : vector<8x384xf32> to vector<8x128xf32>
    %271 = vector.extract_strided_slice %257 {offsets = [0, 128], sizes = [8, 128], strides = [1, 1]} : vector<8x384xf32> to vector<8x128xf32>
    %272 = arith.addf %270, %271 : vector<8x128xf32>
    %273 = arith.negf %272 : vector<8x128xf32>
    %274 = math.exp %273 : vector<8x128xf32>
    %cst_65 = arith.constant 1.000000e+00 : f32
    %275 = vector.broadcast %cst_65 : f32 to vector<8x128xf32>
    %276 = arith.addf %275, %274 : vector<8x128xf32>
    %277 = arith.divf %275, %276 : vector<8x128xf32>
    %278 = vector.extract_strided_slice %261 {offsets = [0, 256], sizes = [8, 128], strides = [1, 1]} : vector<8x384xf32> to vector<8x128xf32>
    %279 = vector.extract_strided_slice %257 {offsets = [0, 256], sizes = [8, 128], strides = [1, 1]} : vector<8x384xf32> to vector<8x128xf32>
    %280 = vector.broadcast %11 : vector<1x128xf32> to vector<8x128xf32>
    %281 = arith.addf %279, %280 : vector<8x128xf32>
    %282 = arith.mulf %269, %281 : vector<8x128xf32>
    %283 = arith.addf %278, %282 : vector<8x128xf32>
    %284 = math.tanh %283 : vector<8x128xf32>
    %cst_66 = arith.constant 1.000000e+00 : f32
    %285 = vector.broadcast %cst_66 : f32 to vector<8x128xf32>
    %286 = arith.subf %285, %277 : vector<8x128xf32>
    %287 = arith.mulf %286, %284 : vector<8x128xf32>
    %288 = arith.mulf %277, %244 : vector<8x128xf32>
    %289 = arith.addf %287, %288 : vector<8x128xf32>
    %290 = vector.shape_cast %255 : vector<8x1xi1> to vector<8x1xi1>
    %291 = vector.broadcast %290 : vector<8x1xi1> to vector<8x128xi1>
    %292 = arith.select %291, %289, %244 : vector<8x128xi1>, vector<8x128xf32>
    %cst_67 = arith.constant 0.000000e+00 : f32
    %293 = vector.shape_cast %255 : vector<8x1xi1> to vector<8x1xi1>
    %294 = vector.broadcast %293 : vector<8x1xi1> to vector<8x128xi1>
    %295 = vector.broadcast %cst_67 : f32 to vector<8x128xf32>
    %296 = arith.select %294, %292, %295 : vector<8x128xi1>, vector<8x128xf32>
    %297 = arith.truncf %296 : vector<8x128xf32> to vector<8x128xbf16>
    %298 = arith.index_cast %c5_i32 : i32 to index
    %c0_68 = arith.constant 0 : index
    %c0_69 = arith.constant 0 : index
    %299 = vector.load %arg14[%298, %c0_68, %c0_69] : memref<8x8x128xbf16, #tpu.memory_space<vmem>>, vector<1x8x128xbf16>
    %300 = vector.shape_cast %299 : vector<1x8x128xbf16> to vector<8x128xbf16>
    %301 = vector.shape_cast %297 : vector<8x128xbf16> to vector<1x8x128xbf16>
    tpu.vector_store %arg14[%298, %c0_68, %c0_69], %301 {strides = array<i32>} : memref<8x8x128xbf16, #tpu.memory_space<vmem>>, vector<1x8x128xbf16>,
    %c6_i32 = arith.constant 6 : i32
    %302 = vector.broadcast %c6_i32 : i32 to vector<8x1xi32>
    %303 = arith.cmpi sgt, %12, %302 : vector<8x1xi32>
    %304 = arith.truncf %292 : vector<8x128xf32> to vector<8x128xbf16>
    %cst_70 = arith.constant dense<0.000000e+00> : vector<8x384xf32>
    %305 = tpu.matmul %304, %10, %cst_70 {dimension_numbers = #tpu.dot_dimension_numbers<[1], [0], [0], [1], [0, 0, 1, 1], [], []>} : vector<8x128xbf16>, vector<128x384xbf16>, vector<8x384xf32> -> vector<8x384xf32>
    %306 = arith.index_cast %c6_i32 : i32 to index
    %c0_71 = arith.constant 0 : index
    %c0_72 = arith.constant 0 : index
    %307 = vector.load %arg13[%306, %c0_71, %c0_72] : memref<8x8x384xbf16, #tpu.memory_space<vmem>>, vector<1x8x384xbf16>
    %308 = vector.shape_cast %307 : vector<1x8x384xbf16> to vector<8x384xbf16>
    %309 = arith.extf %308 : vector<8x384xbf16> to vector<8x384xf32>
    %310 = vector.extract_strided_slice %309 {offsets = [0, 0], sizes = [8, 128], strides = [1, 1]} : vector<8x384xf32> to vector<8x128xf32>
    %311 = vector.extract_strided_slice %305 {offsets = [0, 0], sizes = [8, 128], strides = [1, 1]} : vector<8x384xf32> to vector<8x128xf32>
    %312 = arith.addf %310, %311 : vector<8x128xf32>
    %313 = arith.negf %312 : vector<8x128xf32>
    %314 = math.exp %313 : vector<8x128xf32>
    %cst_73 = arith.constant 1.000000e+00 : f32
    %315 = vector.broadcast %cst_73 : f32 to vector<8x128xf32>
    %316 = arith.addf %315, %314 : vector<8x128xf32>
    %317 = arith.divf %315, %316 : vector<8x128xf32>
    %318 = vector.extract_strided_slice %309 {offsets = [0, 128], sizes = [8, 128], strides = [1, 1]} : vector<8x384xf32> to vector<8x128xf32>
    %319 = vector.extract_strided_slice %305 {offsets = [0, 128], sizes = [8, 128], strides = [1, 1]} : vector<8x384xf32> to vector<8x128xf32>
    %320 = arith.addf %318, %319 : vector<8x128xf32>
    %321 = arith.negf %320 : vector<8x128xf32>
    %322 = math.exp %321 : vector<8x128xf32>
    %cst_74 = arith.constant 1.000000e+00 : f32
    %323 = vector.broadcast %cst_74 : f32 to vector<8x128xf32>
    %324 = arith.addf %323, %322 : vector<8x128xf32>
    %325 = arith.divf %323, %324 : vector<8x128xf32>
    %326 = vector.extract_strided_slice %309 {offsets = [0, 256], sizes = [8, 128], strides = [1, 1]} : vector<8x384xf32> to vector<8x128xf32>
    %327 = vector.extract_strided_slice %305 {offsets = [0, 256], sizes = [8, 128], strides = [1, 1]} : vector<8x384xf32> to vector<8x128xf32>
    %328 = vector.broadcast %11 : vector<1x128xf32> to vector<8x128xf32>
    %329 = arith.addf %327, %328 : vector<8x128xf32>
    %330 = arith.mulf %317, %329 : vector<8x128xf32>
    %331 = arith.addf %326, %330 : vector<8x128xf32>
    %332 = math.tanh %331 : vector<8x128xf32>
    %cst_75 = arith.constant 1.000000e+00 : f32
    %333 = vector.broadcast %cst_75 : f32 to vector<8x128xf32>
    %334 = arith.subf %333, %325 : vector<8x128xf32>
    %335 = arith.mulf %334, %332 : vector<8x128xf32>
    %336 = arith.mulf %325, %292 : vector<8x128xf32>
    %337 = arith.addf %335, %336 : vector<8x128xf32>
    %338 = vector.shape_cast %303 : vector<8x1xi1> to vector<8x1xi1>
    %339 = vector.broadcast %338 : vector<8x1xi1> to vector<8x128xi1>
    %340 = arith.select %339, %337, %292 : vector<8x128xi1>, vector<8x128xf32>
    %cst_76 = arith.constant 0.000000e+00 : f32
    %341 = vector.shape_cast %303 : vector<8x1xi1> to vector<8x1xi1>
    %342 = vector.broadcast %341 : vector<8x1xi1> to vector<8x128xi1>
    %343 = vector.broadcast %cst_76 : f32 to vector<8x128xf32>
    %344 = arith.select %342, %340, %343 : vector<8x128xi1>, vector<8x128xf32>
    %345 = arith.truncf %344 : vector<8x128xf32> to vector<8x128xbf16>
    %346 = arith.index_cast %c6_i32 : i32 to index
    %c0_77 = arith.constant 0 : index
    %c0_78 = arith.constant 0 : index
    %347 = vector.load %arg14[%346, %c0_77, %c0_78] : memref<8x8x128xbf16, #tpu.memory_space<vmem>>, vector<1x8x128xbf16>
    %348 = vector.shape_cast %347 : vector<1x8x128xbf16> to vector<8x128xbf16>
    %349 = vector.shape_cast %345 : vector<8x128xbf16> to vector<1x8x128xbf16>
    tpu.vector_store %arg14[%346, %c0_77, %c0_78], %349 {strides = array<i32>} : memref<8x8x128xbf16, #tpu.memory_space<vmem>>, vector<1x8x128xbf16>,
    %c7_i32 = arith.constant 7 : i32
    %350 = vector.broadcast %c7_i32 : i32 to vector<8x1xi32>
    %351 = arith.cmpi sgt, %12, %350 : vector<8x1xi32>
    %352 = arith.truncf %340 : vector<8x128xf32> to vector<8x128xbf16>
    %cst_79 = arith.constant dense<0.000000e+00> : vector<8x384xf32>
    %353 = tpu.matmul %352, %10, %cst_79 {dimension_numbers = #tpu.dot_dimension_numbers<[1], [0], [0], [1], [0, 0, 1, 1], [], []>} : vector<8x128xbf16>, vector<128x384xbf16>, vector<8x384xf32> -> vector<8x384xf32>
    %354 = arith.index_cast %c7_i32 : i32 to index
    %c0_80 = arith.constant 0 : index
    %c0_81 = arith.constant 0 : index
    %355 = vector.load %arg13[%354, %c0_80, %c0_81] : memref<8x8x384xbf16, #tpu.memory_space<vmem>>, vector<1x8x384xbf16>
    %356 = vector.shape_cast %355 : vector<1x8x384xbf16> to vector<8x384xbf16>
    %357 = arith.extf %356 : vector<8x384xbf16> to vector<8x384xf32>
    %358 = vector.extract_strided_slice %357 {offsets = [0, 0], sizes = [8, 128], strides = [1, 1]} : vector<8x384xf32> to vector<8x128xf32>
    %359 = vector.extract_strided_slice %353 {offsets = [0, 0], sizes = [8, 128], strides = [1, 1]} : vector<8x384xf32> to vector<8x128xf32>
    %360 = arith.addf %358, %359 : vector<8x128xf32>
    %361 = arith.negf %360 : vector<8x128xf32>
    %362 = math.exp %361 : vector<8x128xf32>
    %cst_82 = arith.constant 1.000000e+00 : f32
    %363 = vector.broadcast %cst_82 : f32 to vector<8x128xf32>
    %364 = arith.addf %363, %362 : vector<8x128xf32>
    %365 = arith.divf %363, %364 : vector<8x128xf32>
    %366 = vector.extract_strided_slice %357 {offsets = [0, 128], sizes = [8, 128], strides = [1, 1]} : vector<8x384xf32> to vector<8x128xf32>
    %367 = vector.extract_strided_slice %353 {offsets = [0, 128], sizes = [8, 128], strides = [1, 1]} : vector<8x384xf32> to vector<8x128xf32>
    %368 = arith.addf %366, %367 : vector<8x128xf32>
    %369 = arith.negf %368 : vector<8x128xf32>
    %370 = math.exp %369 : vector<8x128xf32>
    %cst_83 = arith.constant 1.000000e+00 : f32
    %371 = vector.broadcast %cst_83 : f32 to vector<8x128xf32>
    %372 = arith.addf %371, %370 : vector<8x128xf32>
    %373 = arith.divf %371, %372 : vector<8x128xf32>
    %374 = vector.extract_strided_slice %357 {offsets = [0, 256], sizes = [8, 128], strides = [1, 1]} : vector<8x384xf32> to vector<8x128xf32>
    %375 = vector.extract_strided_slice %353 {offsets = [0, 256], sizes = [8, 128], strides = [1, 1]} : vector<8x384xf32> to vector<8x128xf32>
    %376 = vector.broadcast %11 : vector<1x128xf32> to vector<8x128xf32>
    %377 = arith.addf %375, %376 : vector<8x128xf32>
    %378 = arith.mulf %365, %377 : vector<8x128xf32>
    %379 = arith.addf %374, %378 : vector<8x128xf32>
    %380 = math.tanh %379 : vector<8x128xf32>
    %cst_84 = arith.constant 1.000000e+00 : f32
    %381 = vector.broadcast %cst_84 : f32 to vector<8x128xf32>
    %382 = arith.subf %381, %373 : vector<8x128xf32>
    %383 = arith.mulf %382, %380 : vector<8x128xf32>
    %384 = arith.mulf %373, %340 : vector<8x128xf32>
    %385 = arith.addf %383, %384 : vector<8x128xf32>
    %386 = vector.shape_cast %351 : vector<8x1xi1> to vector<8x1xi1>
    %387 = vector.broadcast %386 : vector<8x1xi1> to vector<8x128xi1>
    %388 = arith.select %387, %385, %340 : vector<8x128xi1>, vector<8x128xf32>
    %cst_85 = arith.constant 0.000000e+00 : f32
    %389 = vector.shape_cast %351 : vector<8x1xi1> to vector<8x1xi1>
    %390 = vector.broadcast %389 : vector<8x1xi1> to vector<8x128xi1>
    %391 = vector.broadcast %cst_85 : f32 to vector<8x128xf32>
    %392 = arith.select %390, %388, %391 : vector<8x128xi1>, vector<8x128xf32>
    %393 = arith.truncf %392 : vector<8x128xf32> to vector<8x128xbf16>
    %394 = arith.index_cast %c7_i32 : i32 to index
    %c0_86 = arith.constant 0 : index
    %c0_87 = arith.constant 0 : index
    %395 = vector.load %arg14[%394, %c0_86, %c0_87] : memref<8x8x128xbf16, #tpu.memory_space<vmem>>, vector<1x8x128xbf16>
    %396 = vector.shape_cast %395 : vector<1x8x128xbf16> to vector<8x128xbf16>
    %397 = vector.shape_cast %393 : vector<8x128xbf16> to vector<1x8x128xbf16>
    tpu.vector_store %arg14[%394, %c0_86, %c0_87], %397 {strides = array<i32>} : memref<8x8x128xbf16, #tpu.memory_space<vmem>>, vector<1x8x128xbf16>,
    %c8_i32 = arith.constant 8 : i32
    %c0_88 = arith.constant 0 : index
    %c0_89 = arith.constant 0 : index
    %c0_90 = arith.constant 0 : index
    %398 = vector.load %arg14[%c0_88, %c0_89, %c0_90] : memref<8x8x128xbf16, #tpu.memory_space<vmem>>, vector<8x8x128xbf16>
    %399 = arith.extf %398 : vector<8x8x128xbf16> to vector<8x8x128xf32>
    %400 = arith.truncf %388 : vector<8x128xf32> to vector<8x128xbf16>
    %c0_91 = arith.constant 0 : index
    %c0_92 = arith.constant 0 : index
    %401 = vector.load %arg7[%c0_91, %c0_92] : memref<128x128xbf16, #tpu.memory_space<vmem>>, vector<128x128xbf16>
    %cst_93 = arith.constant dense<0.000000e+00> : vector<8x128xf32>
    %402 = tpu.matmul %400, %401, %cst_93 {dimension_numbers = #tpu.dot_dimension_numbers<[1], [0], [0], [1], [0, 0, 1, 1], [], []>} : vector<8x128xbf16>, vector<128x128xbf16>, vector<8x128xf32> -> vector<8x128xf32>
    %403 = vector.shape_cast %402 : vector<8x128xf32> to vector<1x8x128xf32>
    %404 = vector.broadcast %403 : vector<1x8x128xf32> to vector<8x8x128xf32>
    %405 = arith.mulf %399, %404 : vector<8x8x128xf32>
    %cst_94 = arith.constant dense<0.000000e+00> : vector<8x8xf32>
    %406 = vector.multi_reduction <add>, %405, %cst_94 [2] : vector<8x8x128xf32> to vector<8x8xf32>
    %407 = tpu.iota {dimensions = array<i32: 0>} : vector<8x8xi32>
    %c0_95 = arith.constant 0 : index
    %c0_96 = arith.constant 0 : index
    %408 = vector.load %arg2[%c0_95, %c0_96] : memref<1x8xi32, #tpu.memory_space<vmem>>, vector<1x8xi32>
    %409 = vector.broadcast %408 : vector<1x8xi32> to vector<8x8xi32>
    %410 = arith.cmpi slt, %407, %409 : vector<8x8xi32>
    %cst_97 = arith.constant -1.000000e+30 : f32
    %411 = vector.broadcast %cst_97 : f32 to vector<8x8xf32>
    %412 = arith.select %410, %406, %411 : vector<8x8xi1>, vector<8x8xf32>
    %cst_98 = arith.constant dense<0xFF800000> : vector<8xf32>
    %413 = vector.multi_reduction <maximumf>, %412, %cst_98 [0] : vector<8x8xf32> to vector<8xf32>
    %414 = vector.shape_cast %413 : vector<8xf32> to vector<1x8xf32>
    %415 = vector.broadcast %414 : vector<1x8xf32> to vector<8x8xf32>
    %416 = arith.subf %412, %415 : vector<8x8xf32>
    %417 = math.exp %416 : vector<8x8xf32>
    %cst_99 = arith.constant dense<0.000000e+00> : vector<8xf32>
    %418 = vector.multi_reduction <add>, %417, %cst_99 [0] : vector<8x8xf32> to vector<8xf32>
    %419 = vector.shape_cast %418 : vector<8xf32> to vector<1x8xf32>
    %420 = tpu.reciprocal %419 {approx = true} : vector<1x8xf32> -> vector<1x8xf32>
    %421 = vector.broadcast %420 : vector<1x8xf32> to vector<8x8xf32>
    %422 = arith.mulf %417, %421 : vector<8x8xf32>
    %423 = vector.shape_cast %422 : vector<8x8xf32> to vector<8x8x1xf32>
    %424 = vector.broadcast %423 : vector<8x8x1xf32> to vector<8x8x128xf32>
    %425 = arith.mulf %424, %399 : vector<8x8x128xf32>
    %cst_100 = arith.constant dense<0.000000e+00> : vector<8x128xf32>
    %426 = vector.multi_reduction <add>, %425, %cst_100 [0] : vector<8x8x128xf32> to vector<8x128xf32>
    %427 = arith.truncf %426 : vector<8x128xf32> to vector<8x128xbf16>
    %c0_101 = arith.constant 0 : index
    %c0_102 = arith.constant 0 : index
    %428 = vector.load %arg8[%c0_101, %c0_102] : memref<128x128xbf16, #tpu.memory_space<vmem>>, vector<128x128xbf16>
    %cst_103 = arith.constant dense<0.000000e+00> : vector<8x128xf32>
    %429 = tpu.matmul %427, %428, %cst_103 {dimension_numbers = #tpu.dot_dimension_numbers<[1], [0], [0], [1], [0, 0, 1, 1], [], []>} : vector<8x128xbf16>, vector<128x128xbf16>, vector<8x128xf32> -> vector<8x128xf32>
    %c0_104 = arith.constant 0 : index
    %c0_105 = arith.constant 0 : index
    %430 = vector.load %arg9[%c0_104, %c0_105] : memref<128x128xbf16, #tpu.memory_space<vmem>>, vector<128x128xbf16>
    %cst_106 = arith.constant dense<0.000000e+00> : vector<8x128xf32>
    %431 = tpu.matmul %400, %430, %cst_106 {dimension_numbers = #tpu.dot_dimension_numbers<[1], [0], [0], [1], [0, 0, 1, 1], [], []>} : vector<8x128xbf16>, vector<128x128xbf16>, vector<8x128xf32> -> vector<8x128xf32>
    %432 = arith.addf %429, %431 : vector<8x128xf32>
    %433 = math.tanh %432 : vector<8x128xf32>
    %434 = arith.truncf %433 : vector<8x128xf32> to vector<8x128xbf16>
    %c0_107 = arith.constant 0 : index
    %c0_108 = arith.constant 0 : index
    %435 = vector.load %arg10[%c0_107, %c0_108] : memref<128x128xbf16, #tpu.memory_space<vmem>>, vector<128x128xbf16>
    %cst_109 = arith.constant dense<0.000000e+00> : vector<8x128xf32>
    %436 = tpu.matmul %434, %435, %cst_109 {dimension_numbers = #tpu.dot_dimension_numbers<[1], [0], [0], [1], [0, 0, 1, 1], [], []>} : vector<8x128xbf16>, vector<128x128xbf16>, vector<8x128xf32> -> vector<8x128xf32>
    %c0_110 = arith.constant 0 : index
    %c0_111 = arith.constant 0 : index
    %437 = vector.load %arg11[%c0_110, %c0_111] : memref<1x128xf32, #tpu.memory_space<vmem>>, vector<1x128xf32>
    %438 = vector.broadcast %437 : vector<1x128xf32> to vector<8x128xf32>
    %439 = arith.addf %436, %438 : vector<8x128xf32>
    %cst_112 = arith.constant dense<0xFF800000> : vector<8xf32>
    %440 = vector.multi_reduction <maximumf>, %439, %cst_112 [1] : vector<8x128xf32> to vector<8xf32>
    %441 = vector.shape_cast %440 : vector<8xf32> to vector<8x1xf32>
    %442 = vector.broadcast %441 : vector<8x1xf32> to vector<8x128xf32>
    %443 = arith.subf %439, %442 : vector<8x128xf32>
    %444 = math.exp %443 : vector<8x128xf32>
    %cst_113 = arith.constant dense<0.000000e+00> : vector<8xf32>
    %445 = vector.multi_reduction <add>, %444, %cst_113 [1] : vector<8x128xf32> to vector<8xf32>
    %446 = vector.shape_cast %445 : vector<8xf32> to vector<8x1xf32>
    %447 = math.log %446 : vector<8x1xf32>
    %448 = vector.broadcast %447 : vector<8x1xf32> to vector<8x128xf32>
    %449 = arith.subf %443, %448 : vector<8x128xf32>
    %c0_114 = arith.constant 0 : index
    %c0_115 = arith.constant 0 : index
    %450 = vector.load %arg12[%c0_114, %c0_115] : memref<8x128xf32, #tpu.memory_space<vmem>>, vector<8x128xf32>
    tpu.vector_store %arg12[%c0_114, %c0_115], %449 {strides = array<i32>} : memref<8x128xf32, #tpu.memory_space<vmem>>, vector<8x128xf32>,
    return
  }
}

</mosaic_0001>

<llo_original>
// kernel: tpu_custom_call.1
$region0: #{tpu_custom_call.1}
  #allocation0 [shape = 'u32[]', space=smem, size = 0x4, offset = 0x4, fixed_abs, tag = 'smem constant byte address 0x4 - core index']
  #allocation1 [shape = 'u32[144,128]{1,0:T(1,128)}', space=vmem, size = 0x12000, scoped, tag = 'internal scratch']
  #allocation2 [shape = 'bf16[8,8,384]{2,1,0:T(8,128)(2,1)}', space=vmem, size = 0xc000, scoped, tag = 'scratch operand']
  #allocation3 [shape = 'bf16[8,8,128]{2,1,0:T(8,128)(2,1)}', space=vmem, size = 0x4000, scoped, tag = 'scratch operand']
  %s0 = inlined_call_operand.hbm [shape: bf16[8,8,16], index: 0, kind: input, shape index: {}]
  %s1 = inlined_call_operand.vmem [shape: s32[8,1], index: 1, kind: input, shape index: {}]
  %s2 = inlined_call_operand.vmem [shape: s32[1,8], index: 2, kind: input, shape index: {}]
  %s3 = inlined_call_operand.hbm [shape: bf16[16,384], index: 3, kind: input, shape index: {}]
  %s4 = inlined_call_operand.hbm [shape: bf16[128,384], index: 4, kind: input, shape index: {}]
  %s5 = inlined_call_operand.vmem [shape: f32[1,384], index: 5, kind: input, shape index: {}]
  %s6 = inlined_call_operand.vmem [shape: f32[1,128], index: 6, kind: input, shape index: {}]
  %s7 = inlined_call_operand.hbm [shape: bf16[128,128], index: 7, kind: input, shape index: {}]
  %s8 = inlined_call_operand.hbm [shape: bf16[128,128], index: 8, kind: input, shape index: {}]
  %s9 = inlined_call_operand.hbm [shape: bf16[128,128], index: 9, kind: input, shape index: {}]
  %s10 = inlined_call_operand.hbm [shape: bf16[128,128], index: 10, kind: input, shape index: {}]
  %s11 = inlined_call_operand.vmem [shape: f32[1,128], index: 11, kind: input, shape index: {}]
  %s12 = inlined_call_operand.hbm [shape: f32[8,128], index: 12, kind: output, shape index: {}]
  %s13 = sld [smem:[#allocation0]]
  $region86: #{tpu_custom_call.1} parent=0
    _
  %s15 = ssub.s32 1, %s13
  %s16 = scalar_select 0, %s15, %s13
  $region1: #{tpu_custom_call.1} parent=0
    #allocation4 [shape = 'u8[16384]{0}', space=vmem, size = 0x4000, scoped, tag = 'input window, operand 0, single buffered']
    #allocation5 [shape = 's32[1]{0}', space=sflag, size = 0x4, scoped, tag = 'scoped memory for tpu_custom_call.1']
    #allocation6 [shape = 's32[1]{0}', space=sflag, size = 0x4, scoped, tag = 'scoped memory for tpu_custom_call.1']
    #allocation7 [shape = 'u8[12288]{0}', space=vmem, size = 0x3000, scoped, tag = 'input window, operand 3, single buffered']
    #allocation8 [shape = 's32[1]{0}', space=sflag, size = 0x4, scoped, tag = 'scoped memory for tpu_custom_call.1']
    #allocation9 [shape = 'u8[98304]{0}', space=vmem, size = 0x18000, scoped, tag = 'input window, operand 4, single buffered']
    #allocation10 [shape = 'u8[32768]{0}', space=vmem, size = 0x8000, scoped, tag = 'input window, operand 7, single buffered']
    #allocation11 [shape = 's32[1]{0}', space=sflag, size = 0x4, scoped, tag = 'scoped memory for tpu_custom_call.1']
    #allocation12 [shape = 'u8[32768]{0}', space=vmem, size = 0x8000, scoped, tag = 'input window, operand 8, single buffered']
    #allocation13 [shape = 'u8[32768]{0}', space=vmem, size = 0x8000, scoped, tag = 'input window, operand 9, single buffered']
    #allocation14 [shape = 's32[1]{0}', space=sflag, size = 0x4, scoped, tag = 'scoped memory for tpu_custom_call.1']
    #allocation15 [shape = 'u8[32768]{0}', space=vmem, size = 0x8000, scoped, tag = 'input window, operand 10, single buffered']
    #allocation16 [shape = 'u8[4096]{0}', space=vmem, size = 0x1000, scoped, tag = 'output window, operand 0, single buffered']
    %17 = vsyncpa [#allocation5], 0
    %18 = vsyncpa [#allocation8], 0
    %19 = vsyncpa [#allocation11], 0
    %20 = vsyncpa [#allocation14], 0
    %21 = vsyncpa [#allocation6], 0
    // Predicated region
    $region2: #{tpu_custom_call.1} parent=1 // pred_check
      _
    $region3: #{tpu_custom_call.1} parent=1 // pred_check_branch
      %23 = sbr.rel (0) target = $region5
    $region4: #{tpu_custom_call.1} parent=1 // pred_region
      %s25 = ssub.s32 512, 512
      %26 = vsyncadd [#allocation5], %s25
      %s27 = sshll.u32 [#allocation4], 4
      %s28 = int_to_ptr.vmem [resolvable:$true] %s27
      %33 = dma.hbm_to_vmem [thread:$0]  %s0, 512, %s28, [#allocation5], 64, 64, 4
    $region5: #{tpu_custom_call.1} parent=1 // pred_fallthru
      _
    // Predicated region
    $region6: #{tpu_custom_call.1} parent=1 // pred_check
      _
    $region7: #{tpu_custom_call.1} parent=1 // pred_check_branch
      %35 = sbr.rel (0) target = $region9
    $region8: #{tpu_custom_call.1} parent=1 // pred_region
      _
    $region9: #{tpu_custom_call.1} parent=1 // pred_fallthru
      _
    // Predicated region
    $region10: #{tpu_custom_call.1} parent=1 // pred_check
      _
    $region11: #{tpu_custom_call.1} parent=1 // pred_check_branch
      %37 = sbr.rel (0) target = $region13
    $region12: #{tpu_custom_call.1} parent=1 // pred_region
      _
    $region13: #{tpu_custom_call.1} parent=1 // pred_fallthru
      _
    // Predicated region
    $region14: #{tpu_custom_call.1} parent=1 // pred_check
      _
    $region15: #{tpu_custom_call.1} parent=1 // pred_check_branch
      %39 = sbr.rel (0) target = $region17
    $region16: #{tpu_custom_call.1} parent=1 // pred_region
      %s41 = ssub.s32 384, 384
      %42 = vsyncadd [#allocation8], %s41
      %s43 = sshll.u32 [#allocation7], 4
      %s44 = int_to_ptr.vmem [resolvable:$true] %s43
      %49 = dma.hbm_to_vmem [thread:$0]  %s3, 384, %s44, [#allocation8], 192, 192, 12
    $region17: #{tpu_custom_call.1} parent=1 // pred_fallthru
      _
    // Predicated region
    $region18: #{tpu_custom_call.1} parent=1 // pred_check
      _
    $region19: #{tpu_custom_call.1} parent=1 // pred_check_branch
      %51 = sbr.rel (0) target = $region21
    $region20: #{tpu_custom_call.1} parent=1 // pred_region
      %s53 = ssub.s32 3072, 3072
      %54 = vsyncadd [#allocation8], %s53
      %s55 = sshll.u32 [#allocation9], 4
      %s56 = int_to_ptr.vmem [resolvable:$true] %s55
      %61 = dma.hbm_to_vmem [thread:$0]  %s4, 3072, %s56, [#allocation8], 192, 192, 12
    $region21: #{tpu_custom_call.1} parent=1 // pred_fallthru
      _
    // Predicated region
    $region22: #{tpu_custom_call.1} parent=1 // pred_check
      _
    $region23: #{tpu_custom_call.1} parent=1 // pred_check_branch
      %63 = sbr.rel (0) target = $region25
    $region24: #{tpu_custom_call.1} parent=1 // pred_region
      _
    $region25: #{tpu_custom_call.1} parent=1 // pred_fallthru
      _
    // Predicated region
    $region26: #{tpu_custom_call.1} parent=1 // pred_check
      _
    $region27: #{tpu_custom_call.1} parent=1 // pred_check_branch
      %65 = sbr.rel (0) target = $region29
    $region28: #{tpu_custom_call.1} parent=1 // pred_region
      _
    $region29: #{tpu_custom_call.1} parent=1 // pred_fallthru
      _
    // Predicated region
    $region30: #{tpu_custom_call.1} parent=1 // pred_check
      _
    $region31: #{tpu_custom_call.1} parent=1 // pred_check_branch
      %67 = sbr.rel (0) target = $region33
    $region32: #{tpu_custom_call.1} parent=1 // pred_region
      %s69 = ssub.s32 1024, 1024
      %70 = vsyncadd [#allocation11], %s69
      %s71 = sshll.u32 [#allocation10], 4
      %s72 = int_to_ptr.vmem [resolvable:$true] %s71
      %77 = dma.hbm_to_vmem [thread:$0]  %s7, 1024, %s72, [#allocation11], 64, 64, 4
    $region33: #{tpu_custom_call.1} parent=1 // pred_fallthru
      _
    // Predicated region
    $region34: #{tpu_custom_call.1} parent=1 // pred_check
      _
    $region35: #{tpu_custom_call.1} parent=1 // pred_check_branch
      %79 = sbr.rel (0) target = $region37
    $region36: #{tpu_custom_call.1} parent=1 // pred_region
      %s81 = ssub.s32 1024, 1024
      %82 = vsyncadd [#allocation11], %s81
      %s83 = sshll.u32 [#allocation12], 4
      %s84 = int_to_ptr.vmem [resolvable:$true] %s83
      %89 = dma.hbm_to_vmem [thread:$0]  %s8, 1024, %s84, [#allocation11], 64, 64, 4
    $region37: #{tpu_custom_call.1} parent=1 // pred_fallthru
      _
    // Predicated region
    $region38: #{tpu_custom_call.1} parent=1 // pred_check
      _
    $region39: #{tpu_custom_call.1} parent=1 // pred_check_branch
      %91 = sbr.rel (0) target = $region41
    $region40: #{tpu_custom_call.1} parent=1 // pred_region
      %s93 = ssub.s32 1024, 1024
      %94 = vsyncadd [#allocation14], %s93
      %s95 = sshll.u32 [#allocation13], 4
      %s96 = int_to_ptr.vmem [resolvable:$true] %s95
      %101 = dma.hbm_to_vmem [thread:$0]  %s9, 1024, %s96, [#allocation14], 64, 64, 4
    $region41: #{tpu_custom_call.1} parent=1 // pred_fallthru
      _
    // Predicated region
    $region42: #{tpu_custom_call.1} parent=1 // pred_check
      _
    $region43: #{tpu_custom_call.1} parent=1 // pred_check_branch
      %103 = sbr.rel (0) target = $region45
    $region44: #{tpu_custom_call.1} parent=1 // pred_region
      %s105 = ssub.s32 1024, 1024
      %106 = vsyncadd [#allocation14], %s105
      %s107 = sshll.u32 [#allocation15], 4
      %s108 = int_to_ptr.vmem [resolvable:$true] %s107
      %113 = dma.hbm_to_vmem [thread:$0]  %s10, 1024, %s108, [#allocation14], 64, 64, 4
    $region45: #{tpu_custom_call.1} parent=1 // pred_fallthru
      _
    // Predicated region
    $region46: #{tpu_custom_call.1} parent=1 // pred_check
      _
    $region47: #{tpu_custom_call.1} parent=1 // pred_check_branch
      %115 = sbr.rel (0) target = $region49
    $region48: #{tpu_custom_call.1} parent=1 // pred_region
      _
    $region49: #{tpu_custom_call.1} parent=1 // pred_fallthru
      _
    // Predicated region
    $region50: #{tpu_custom_call.1} parent=1 // pred_check
      _
    $region51: #{tpu_custom_call.1} parent=1 // pred_check_branch
      %117 = sbr.rel (0) target = $region53
    $region52: #{tpu_custom_call.1} parent=1 // pred_region
      %118 = dma.done [#allocation5], 512
    $region53: #{tpu_custom_call.1} parent=1 // pred_fallthru
      _
    // Predicated region
    $region54: #{tpu_custom_call.1} parent=1 // pred_check
      _
    $region55: #{tpu_custom_call.1} parent=1 // pred_check_branch
      %120 = sbr.rel (0) target = $region57
    $region56: #{tpu_custom_call.1} parent=1 // pred_region
      %121 = dma.done [#allocation8], 384
    $region57: #{tpu_custom_call.1} parent=1 // pred_fallthru
      _
    // Predicated region
    $region58: #{tpu_custom_call.1} parent=1 // pred_check
      _
    $region59: #{tpu_custom_call.1} parent=1 // pred_check_branch
      %123 = sbr.rel (0) target = $region61
    $region60: #{tpu_custom_call.1} parent=1 // pred_region
      %124 = dma.done [#allocation8], 3072
    $region61: #{tpu_custom_call.1} parent=1 // pred_fallthru
      _
    // Predicated region
    $region62: #{tpu_custom_call.1} parent=1 // pred_check
      _
    $region63: #{tpu_custom_call.1} parent=1 // pred_check_branch
      %126 = sbr.rel (0) target = $region65
    $region64: #{tpu_custom_call.1} parent=1 // pred_region
      %127 = dma.done [#allocation11], 1024
    $region65: #{tpu_custom_call.1} parent=1 // pred_fallthru
      _
    // Predicated region
    $region66: #{tpu_custom_call.1} parent=1 // pred_check
      _
    $region67: #{tpu_custom_call.1} parent=1 // pred_check_branch
      %129 = sbr.rel (0) target = $region69
    $region68: #{tpu_custom_call.1} parent=1 // pred_region
      %130 = dma.done [#allocation11], 1024
    $region69: #{tpu_custom_call.1} parent=1 // pred_fallthru
      _
    // Predicated region
    $region70: #{tpu_custom_call.1} parent=1 // pred_check
      _
    $region71: #{tpu_custom_call.1} parent=1 // pred_check_branch
      %132 = sbr.rel (0) target = $region73
    $region72: #{tpu_custom_call.1} parent=1 // pred_region
      %133 = dma.done [#allocation14], 1024
    $region73: #{tpu_custom_call.1} parent=1 // pred_fallthru
      _
    // Predicated region
    $region74: #{tpu_custom_call.1} parent=1 // pred_check
      _
    $region75: #{tpu_custom_call.1} parent=1 // pred_check_branch
      %135 = sbr.rel (0) target = $region77
    $region76: #{tpu_custom_call.1} parent=1 // pred_region
      %136 = dma.done [#allocation14], 1024
    $region77: #{tpu_custom_call.1} parent=1 // pred_fallthru
      _
    %v138 = vld [vmem:[#allocation4] sm:$0xf]
    %v139 = vld [vmem:[#allocation4 + $0x4] sm:$0xf]
    %v140 = vld [vmem:[#allocation4 + $0x8] sm:$0xf]
    %v141 = vld [vmem:[#allocation4 + $0xc] sm:$0xf]
    %v142 = vld [vmem:[#allocation4 + $0x10] sm:$0xf]
    %v143 = vld [vmem:[#allocation4 + $0x14] sm:$0xf]
    %v144 = vld [vmem:[#allocation4 + $0x18] sm:$0xf]
    %v145 = vld [vmem:[#allocation4 + $0x1c] sm:$0xf]
    %v146 = vld [vmem:[#allocation7] sm:$0xff]
    %v147 = vld [vmem:[#allocation7 + $0x8] sm:$0xf]
    %v148 = vld [vmem:[#allocation7 + $0xc] sm:$0xff]
    %v149 = vld [vmem:[#allocation7 + $0x14] sm:$0xf]
    %v150 = vld [vmem:[%s5] sm:$0x7]
    %v152 = vlaneseq
    %v153 = vshrl.u32 %v152, 7
    %v154 = vsub.s32 0, %v153
    %v155 = vrot.slane %v150, %v154
    %v156 = vlaneseq
    %v157 = vshrl.u32 %v156, 7
    %v158 = vsub.s32 1, %v157
    %v159 = vrot.slane %v150, %v158
    %v160 = vlaneseq
    %v161 = vshrl.u32 %v160, 7
    %v162 = vsub.s32 2, %v161
    %v163 = vrot.slane %v150, %v162
    %v175 = vunpack.c.l.b16 %v138
    %v176 = vunpack.c.l.b16 %v139
    %v177 = vunpack.c.l.b16 %v140
    %v178 = vunpack.c.l.b16 %v141
    %v179 = vunpack.c.l.b16 %v142
    %v180 = vunpack.c.l.b16 %v143
    %v181 = vunpack.c.l.b16 %v144
    %v182 = vunpack.c.l.b16 %v145
    %v183 = vpack.c.b16 %v176, %v175
    %v184 = vpack.c.b16 %v178, %v177
    %v185 = vpack.c.b16 %v180, %v179
    %v186 = vpack.c.b16 %v182, %v181
    %v191 = vunpack.c.l.b16 %v146
    %v192 = vunpack.c.h.b16 %v146
    %v193 = vunpack.c.l.b16 %v147
    %v194 = vunpack.c.l.b16 %v148
    %v195 = vunpack.c.h.b16 %v148
    %v196 = vunpack.c.l.b16 %v149
    %v197 = vpack.c.b16 %v194, %v191
    %v198 = vpack.c.b16 %v195, %v192
    %v199 = vpack.c.b16 %v196, %v193
    %vm203 = vcmask 130048
    %v205 = vsel %vm203, %v183, 0
    %v208 = vsel %vm203, %v184, 0
    %v211 = vsel %vm203, %v185, 0
    %v214 = vsel %vm203, %v186, 0
    %216 = vmatprep.subr.bf16.mxu0 0
    %217 = vmatpush1.bf16.msra.mxu0 0
    %218 = vmatprep.subr.bf16.mxu0 0
    %219 = vmatpush1.bf16.msra.mxu0 0
    %220 = vmatprep.subr.bf16.mxu0 0
    %221 = vmatpush1.bf16.msra.mxu0 0
    %222 = vmatprep.subr.bf16.mxu0 0
    %223 = vmatpush1.bf16.msra.mxu0 0
    %224 = vmatprep.subr.bf16.mxu0 0
    %225 = vmatpush1.bf16.msra.mxu0 0
    %226 = vmatprep.subr.bf16.mxu0 0
    %227 = vmatpush1.bf16.msra.mxu0 0
    %228 = vmatprep.subr.bf16.mxu0 0
    %229 = vmatpush1.bf16.msra.mxu0 0
    %230 = vmatprep.subr.bf16.mxu0 %v198
    %231 = vmatpush1.bf16.msra.mxu0 %v197
    %232 = vmatprep.subr.bf16.mxu0 0
    %233 = vmatpush2.bf16.msra.mxu0 0
    %234 = vmatprep.subr.bf16.mxu0 0
    %235 = vmatpush2.bf16.msra.mxu0 0
    %236 = vmatprep.subr.bf16.mxu0 0
    %237 = vmatpush2.bf16.msra.mxu0 0
    %238 = vmatprep.subr.bf16.mxu0 0
    %239 = vmatpush2.bf16.msra.mxu0 0
    %240 = vmatprep.subr.bf16.mxu0 0
    %241 = vmatpush2.bf16.msra.mxu0 0
    %242 = vmatprep.subr.bf16.mxu0 0
    %243 = vmatpush2.bf16.msra.mxu0 0
    %244 = vmatprep.subr.bf16.mxu0 0
    %245 = vmatpush2.bf16.msra.mxu0 0
    %246 = vmatprep.subr.bf16.mxu0 0
    %247 = vmatpush2.bf16.msra.mxu0 0
    %248 = vmatprep.mubr.bf16.mxu0 0
    %249 = vmatmul.mubr.bf16.gmra.mxu0 %v205
    %v250 = vpop.f32.mrf.mxu0
    %v251 = vadd.f32 %v155, %v250
    %v252 = vpop.f32.mrf.mxu0
    %v253 = vadd.f32 %v159, %v252
    %v254 = vpop.f32.mrf.mxu0
    %v255 = vadd.f32 %v155, %v254
    %v256 = vpop.f32.mrf.mxu0
    %v257 = vadd.f32 %v159, %v256
    %258 = vmatprep.mubr.bf16.mxu0 0
    %259 = vmatmul.mubr.bf16.gmra.mxu0 %v208
    %v260 = vpop.f32.mrf.mxu0
    %v261 = vadd.f32 %v155, %v260
    %v262 = vpop.f32.mrf.mxu0
    %v263 = vadd.f32 %v159, %v262
    %v264 = vpop.f32.mrf.mxu0
    %v265 = vadd.f32 %v155, %v264
    %v266 = vpop.f32.mrf.mxu0
    %v267 = vadd.f32 %v159, %v266
    %268 = vmatprep.mubr.bf16.mxu0 0
    %269 = vmatmul.mubr.bf16.gmra.mxu0 %v211
    %v270 = vpop.f32.mrf.mxu0
    %v271 = vadd.f32 %v155, %v270
    %v272 = vpop.f32.mrf.mxu0
    %v273 = vadd.f32 %v159, %v272
    %v274 = vpop.f32.mrf.mxu0
    %v275 = vadd.f32 %v155, %v274
    %v276 = vpop.f32.mrf.mxu0
    %v277 = vadd.f32 %v159, %v276
    %278 = vmatprep.mubr.bf16.mxu0 0
    %279 = vmatmul.mubr.bf16.gmra.mxu0 %v214
    %v280 = vpop.f32.mrf.mxu0
    %v281 = vadd.f32 %v155, %v280
    %v282 = vpop.f32.mrf.mxu0
    %v283 = vadd.f32 %v159, %v282
    %v284 = vpop.f32.mrf.mxu0
    %v285 = vadd.f32 %v155, %v284
    %v286 = vpop.f32.mrf.mxu0
    %v287 = vadd.f32 %v159, %v286
    %288 = vdwg.mxu0
    %289 = vmatprep.subr.bf16.mxu0 0
    %290 = vmatpush1.bf16.msra.mxu0 0
    %291 = vmatprep.subr.bf16.mxu0 0
    %292 = vmatpush1.bf16.msra.mxu0 0
    %293 = vmatprep.subr.bf16.mxu0 0
    %294 = vmatpush1.bf16.msra.mxu0 0
    %295 = vmatprep.subr.bf16.mxu0 0
    %296 = vmatpush1.bf16.msra.mxu0 0
    %297 = vmatprep.subr.bf16.mxu0 0
    %298 = vmatpush1.bf16.msra.mxu0 0
    %299 = vmatprep.subr.bf16.mxu0 0
    %300 = vmatpush1.bf16.msra.mxu0 0
    %301 = vmatprep.subr.bf16.mxu0 0
    %302 = vmatpush1.bf16.msra.mxu0 0
    %303 = vmatprep.subr.bf16.mxu0 0
    %304 = vmatpush1.bf16.msra.mxu0 %v199
    %305 = vmatprep.subr.bf16.mxu0 0
    %306 = vmatpush2.bf16.msra.mxu0 0
    %307 = vmatprep.subr.bf16.mxu0 0
    %308 = vmatpush2.bf16.msra.mxu0 0
    %309 = vmatprep.subr.bf16.mxu0 0
    %310 = vmatpush2.bf16.msra.mxu0 0
    %311 = vmatprep.subr.bf16.mxu0 0
    %312 = vmatpush2.bf16.msra.mxu0 0
    %313 = vmatprep.subr.bf16.mxu0 0
    %314 = vmatpush2.bf16.msra.mxu0 0
    %315 = vmatprep.subr.bf16.mxu0 0
    %316 = vmatpush2.bf16.msra.mxu0 0
    %317 = vmatprep.subr.bf16.mxu0 0
    %318 = vmatpush2.bf16.msra.mxu0 0
    %319 = vmatprep.subr.bf16.mxu0 0
    %320 = vmatpush2.bf16.msra.mxu0 0
    %321 = vmatprep.mubr.bf16.mxu0 0
    %322 = vmatmul.mubr.bf16.gmra.mxu0 %v205
    %v323 = vpop.f32.mrf.mxu0
    %v324 = vadd.f32 %v163, %v323
    %v325 = vpop.f32.mrf.mxu0
    %v326 = vpop.f32.mrf.mxu0
    %v327 = vadd.f32 %v163, %v326
    %v328 = vpop.f32.mrf.mxu0
    %329 = vmatprep.mubr.bf16.mxu0 0
    %330 = vmatmul.mubr.bf16.gmra.mxu0 %v208
    %v331 = vpop.f32.mrf.mxu0
    %v332 = vadd.f32 %v163, %v331
    %v333 = vpop.f32.mrf.mxu0
    %v334 = vpop.f32.mrf.mxu0
    %v335 = vadd.f32 %v163, %v334
    %v336 = vpop.f32.mrf.mxu0
    %337 = vmatprep.mubr.bf16.mxu0 0
    %338 = vmatmul.mubr.bf16.gmra.mxu0 %v211
    %v339 = vpop.f32.mrf.mxu0
    %v340 = vadd.f32 %v163, %v339
    %v341 = vpop.f32.mrf.mxu0
    %v342 = vpop.f32.mrf.mxu0
    %v343 = vadd.f32 %v163, %v342
    %v344 = vpop.f32.mrf.mxu0
    %345 = vmatprep.mubr.bf16.mxu0 0
    %346 = vmatmul.mubr.bf16.gmra.mxu0 %v214
    %v347 = vpop.f32.mrf.mxu0
    %v348 = vadd.f32 %v163, %v347
    %v349 = vpop.f32.mrf.mxu0
    %v350 = vpop.f32.mrf.mxu0
    %v351 = vadd.f32 %v163, %v350
    %v352 = vpop.f32.mrf.mxu0
    %353 = vdwg.mxu0
    %v354 = vpack.c.bf16 %v255, %v251
    %v355 = vpack.c.bf16 %v257, %v253
    %v356 = vpack.c.bf16 %v327, %v324
    %v357 = vpack.c.bf16 %v265, %v261
    %v358 = vpack.c.bf16 %v267, %v263
    %v359 = vpack.c.bf16 %v335, %v332
    %v360 = vpack.c.bf16 %v275, %v271
    %v361 = vpack.c.bf16 %v277, %v273
    %v362 = vpack.c.bf16 %v343, %v340
    %v363 = vpack.c.bf16 %v285, %v281
    %v364 = vpack.c.bf16 %v287, %v283
    %v365 = vpack.c.bf16 %v351, %v348
    %v378 = vunpack.c.l.b16 %v354
    %v379 = vunpack.c.l.b16 %v355
    %v380 = vunpack.c.l.b16 %v356
    %v381 = vunpack.c.h.b16 %v354
    %v382 = vunpack.c.h.b16 %v355
    %v383 = vunpack.c.h.b16 %v356
    %v384 = vunpack.c.l.b16 %v357
    %v385 = vunpack.c.l.b16 %v358
    %v386 = vunpack.c.l.b16 %v359
    %v387 = vunpack.c.h.b16 %v357
    %v388 = vunpack.c.h.b16 %v358
    %v389 = vunpack.c.h.b16 %v359
    %v390 = vunpack.c.l.b16 %v360
    %v391 = vunpack.c.l.b16 %v361
    %v392 = vunpack.c.l.b16 %v362
    %v393 = vunpack.c.h.b16 %v360
    %v394 = vunpack.c.h.b16 %v361
    %v395 = vunpack.c.h.b16 %v362
    %v396 = vunpack.c.l.b16 %v363
    %v397 = vunpack.c.l.b16 %v364
    %v398 = vunpack.c.l.b16 %v365
    %v399 = vunpack.c.h.b16 %v363
    %v400 = vunpack.c.h.b16 %v364
    %v401 = vunpack.c.h.b16 %v365
    %v402 = vpack.c.b16 %v379, %v378
    %v403 = vpack.c.b16 %v380, %v380
    %v404 = vpack.c.b16 %v382, %v381
    %v405 = vpack.c.b16 %v383, %v383
    %v406 = vpack.c.b16 %v385, %v384
    %v407 = vpack.c.b16 %v386, %v386
    %v408 = vpack.c.b16 %v388, %v387
    %v409 = vpack.c.b16 %v389, %v389
    %v410 = vpack.c.b16 %v391, %v390
    %v411 = vpack.c.b16 %v392, %v392
    %v412 = vpack.c.b16 %v394, %v393
    %v413 = vpack.c.b16 %v395, %v395
    %v414 = vpack.c.b16 %v397, %v396
    %v415 = vpack.c.b16 %v398, %v398
    %v416 = vpack.c.b16 %v400, %v399
    %v417 = vpack.c.b16 %v401, %v401
    %434 = vst [vmem:[#allocation2] sm:$0xff] %v402
    %435 = vst [vmem:[#allocation2 + $0x8] sm:$0xf] %v403
    %436 = vst [vmem:[#allocation2 + $0xc] sm:$0xff] %v404
    %437 = vst [vmem:[#allocation2 + $0x14] sm:$0xf] %v405
    %438 = vst [vmem:[#allocation2 + $0x18] sm:$0xff] %v406
    %439 = vst [vmem:[#allocation2 + $0x20] sm:$0xf] %v407
    %440 = vst [vmem:[#allocation2 + $0x24] sm:$0xff] %v408
    %441 = vst [vmem:[#allocation2 + $0x2c] sm:$0xf] %v409
    %442 = vst [vmem:[#allocation2 + $0x30] sm:$0xff] %v410
    %443 = vst [vmem:[#allocation2 + $0x38] sm:$0xf] %v411
    %444 = vst [vmem:[#allocation2 + $0x3c] sm:$0xff] %v412
    %445 = vst [vmem:[#allocation2 + $0x44] sm:$0xf] %v413
    %446 = vst [vmem:[#allocation2 + $0x48] sm:$0xff] %v414
    %447 = vst [vmem:[#allocation2 + $0x50] sm:$0xf] %v415
    %448 = vst [vmem:[#allocation2 + $0x54] sm:$0xff] %v416
    %449 = vst [vmem:[#allocation2 + $0x5c] sm:$0xf] %v417
    %v450 = vld [vmem:[#allocation9] sm:$0xff]
    %v451 = vld [vmem:[#allocation9 + $0x8] sm:$0xf]
    %v452 = vld [vmem:[#allocation9 + $0xc] sm:$0xff]
    %v453 = vld [vmem:[#allocation9 + $0x14] sm:$0xf]
    %v454 = vld [vmem:[#allocation9 + $0x18] sm:$0xff]
    %v455 = vld [vmem:[#allocation9 + $0x20] sm:$0xf]
    %v456 = vld [vmem:[#allocation9 + $0x24] sm:$0xff]
    %v457 = vld [vmem:[#allocation9 + $0x2c] sm:$0xf]
    %v458 = vld [vmem:[#allocation9 + $0x30] sm:$0xff]
    %v459 = vld [vmem:[#allocation9 + $0x38] sm:$0xf]
    %v460 = vld [vmem:[#allocation9 + $0x3c] sm:$0xff]
    %v461 = vld [vmem:[#allocation9 + $0x44] sm:$0xf]
    %v462 = vld [vmem:[#allocation9 + $0x48] sm:$0xff]
    %v463 = vld [vmem:[#allocation9 + $0x50] sm:$0xf]
    %v464 = vld [vmem:[#allocation9 + $0x54] sm:$0xff]
    %v465 = vld [vmem:[#allocation9 + $0x5c] sm:$0xf]
    %v466 = vld [vmem:[#allocation9 + $0x60] sm:$0xff]
    %v467 = vld [vmem:[#allocation9 + $0x68] sm:$0xf]
    %v468 = vld [vmem:[#allocation9 + $0x6c] sm:$0xff]
    %v469 = vld [vmem:[#allocation9 + $0x74] sm:$0xf]
    %v470 = vld [vmem:[#allocation9 + $0x78] sm:$0xff]
    %v471 = vld [vmem:[#allocation9 + $0x80] sm:$0xf]
    %v472 = vld [vmem:[#allocation9 + $0x84] sm:$0xff]
    %v473 = vld [vmem:[#allocation9 + $0x8c] sm:$0xf]
    %v474 = vld [vmem:[#allocation9 + $0x90] sm:$0xff]
    %v475 = vld [vmem:[#allocation9 + $0x98] sm:$0xf]
    %v476 = vld [vmem:[#allocation9 + $0x9c] sm:$0xff]
    %v477 = vld [vmem:[#allocation9 + $0xa4] sm:$0xf]
    %v478 = vld [vmem:[#allocation9 + $0xa8] sm:$0xff]
    %v479 = vld [vmem:[#allocation9 + $0xb0] sm:$0xf]
    %v480 = vld [vmem:[#allocation9 + $0xb4] sm:$0xff]
    %v481 = vld [vmem:[#allocation9 + $0xbc] sm:$0xf]
    %v482 = vld [vmem:[%s6] sm:$0x1]
    %v483 = vld [vmem:[%s1] sm:$0xff]
    %vm484 = vcmp.gt.s32.totalorder %v483, 0
    %v517 = vunpack.c.l.b16 %v450
    %v518 = vunpack.c.h.b16 %v450
    %v519 = vunpack.c.l.b16 %v451
    %v520 = vunpack.c.l.b16 %v452
    %v521 = vunpack.c.h.b16 %v452
    %v522 = vunpack.c.l.b16 %v453
    %v523 = vunpack.c.l.b16 %v454
    %v524 = vunpack.c.h.b16 %v454
    %v525 = vunpack.c.l.b16 %v455
    %v526 = vunpack.c.l.b16 %v456
    %v527 = vunpack.c.h.b16 %v456
    %v528 = vunpack.c.l.b16 %v457
    %v529 = vunpack.c.l.b16 %v458
    %v530 = vunpack.c.h.b16 %v458
    %v531 = vunpack.c.l.b16 %v459
    %v532 = vunpack.c.l.b16 %v460
    %v533 = vunpack.c.h.b16 %v460
    %v534 = vunpack.c.l.b16 %v461
    %v535 = vunpack.c.l.b16 %v462
    %v536 = vunpack.c.h.b16 %v462
    %v537 = vunpack.c.l.b16 %v463
    %v538 = vunpack.c.l.b16 %v464
    %v539 = vunpack.c.h.b16 %v464
    %v540 = vunpack.c.l.b16 %v465
    %v541 = vunpack.c.l.b16 %v466
    %v542 = vunpack.c.h.b16 %v466
    %v543 = vunpack.c.l.b16 %v467
    %v544 = vunpack.c.l.b16 %v468
    %v545 = vunpack.c.h.b16 %v468
    %v546 = vunpack.c.l.b16 %v469
    %v547 = vunpack.c.l.b16 %v470
    %v548 = vunpack.c.h.b16 %v470
    %v549 = vunpack.c.l.b16 %v471
    %v550 = vunpack.c.l.b16 %v472
    %v551 = vunpack.c.h.b16 %v472
    %v552 = vunpack.c.l.b16 %v473
    %v553 = vunpack.c.l.b16 %v474
    %v554 = vunpack.c.h.b16 %v474
    %v555 = vunpack.c.l.b16 %v475
    %v556 = vunpack.c.l.b16 %v476
    %v557 = vunpack.c.h.b16 %v476
    %v558 = vunpack.c.l.b16 %v477
    %v559 = vunpack.c.l.b16 %v478
    %v560 = vunpack.c.h.b16 %v478
    %v561 = vunpack.c.l.b16 %v479
    %v562 = vunpack.c.l.b16 %v480
    %v563 = vunpack.c.h.b16 %v480
    %v564 = vunpack.c.l.b16 %v481
    %v565 = vpack.c.b16 %v520, %v517
    %v566 = vpack.c.b16 %v521, %v518
    %v567 = vpack.c.b16 %v522, %v519
    %v568 = vpack.c.b16 %v526, %v523
    %v569 = vpack.c.b16 %v527, %v524
    %v570 = vpack.c.b16 %v528, %v525
    %v571 = vpack.c.b16 %v532, %v529
    %v572 = vpack.c.b16 %v533, %v530
    %v573 = vpack.c.b16 %v534, %v531
    %v574 = vpack.c.b16 %v538, %v535
    %v575 = vpack.c.b16 %v539, %v536
    %v576 = vpack.c.b16 %v540, %v537
    %v577 = vpack.c.b16 %v544, %v541
    %v578 = vpack.c.b16 %v545, %v542
    %v579 = vpack.c.b16 %v546, %v543
    %v580 = vpack.c.b16 %v550, %v547
    %v581 = vpack.c.b16 %v551, %v548
    %v582 = vpack.c.b16 %v552, %v549
    %v583 = vpack.c.b16 %v556, %v553
    %v584 = vpack.c.b16 %v557, %v554
    %v585 = vpack.c.b16 %v558, %v555
    %v586 = vpack.c.b16 %v562, %v559
    %v587 = vpack.c.b16 %v563, %v560
    %v588 = vpack.c.b16 %v564, %v561
    %613 = vmatprep.subr.bf16.mxu0 %v587
    %614 = vmatpush1.bf16.msra.mxu0 %v586
    %615 = vmatprep.subr.bf16.mxu0 %v584
    %616 = vmatpush1.bf16.msra.mxu0 %v583
    %617 = vmatprep.subr.bf16.mxu0 %v581
    %618 = vmatpush1.bf16.msra.mxu0 %v580
    %619 = vmatprep.subr.bf16.mxu0 %v578
    %620 = vmatpush1.bf16.msra.mxu0 %v577
    %621 = vmatprep.subr.bf16.mxu0 %v575
    %622 = vmatpush1.bf16.msra.mxu0 %v574
    %623 = vmatprep.subr.bf16.mxu0 %v572
    %624 = vmatpush1.bf16.msra.mxu0 %v571
    %625 = vmatprep.subr.bf16.mxu0 %v569
    %626 = vmatpush1.bf16.msra.mxu0 %v568
    %627 = vmatprep.subr.bf16.mxu0 %v566
    %628 = vmatpush1.bf16.msra.mxu0 %v565
    %629 = vmatprep.subr.bf16.mxu0 0
    %630 = vmatpush2.bf16.msra.mxu0 0
    %631 = vmatprep.subr.bf16.mxu0 0
    %632 = vmatpush2.bf16.msra.mxu0 0
    %633 = vmatprep.subr.bf16.mxu0 0
    %634 = vmatpush2.bf16.msra.mxu0 0
    %635 = vmatprep.subr.bf16.mxu0 0
    %636 = vmatpush2.bf16.msra.mxu0 0
    %637 = vmatprep.subr.bf16.mxu0 0
    %638 = vmatpush2.bf16.msra.mxu0 0
    %639 = vmatprep.subr.bf16.mxu0 0
    %640 = vmatpush2.bf16.msra.mxu0 0
    %641 = vmatprep.subr.bf16.mxu0 0
    %642 = vmatpush2.bf16.msra.mxu0 0
    %643 = vmatprep.subr.bf16.mxu0 0
    %644 = vmatpush2.bf16.msra.mxu0 0
    %645 = vmatprep.mubr.bf16.mxu0 0
    %646 = vmatmul.mubr.bf16.gmra.mxu0 0
    %v647 = vpop.f32.mrf.mxu0
    %v648 = vadd.f32 0.0, %v647
    %v649 = vpop.f32.mrf.mxu0
    %v650 = vadd.f32 0.0, %v649
    %v651 = vpop.f32.mrf.mxu0
    %v652 = vpop.f32.mrf.mxu0
    %653 = vdwg.mxu0
    %654 = vmatprep.subr.bf16.mxu0 0
    %655 = vmatpush1.bf16.msra.mxu0 %v588
    %656 = vmatprep.subr.bf16.mxu0 0
    %657 = vmatpush1.bf16.msra.mxu0 %v585
    %658 = vmatprep.subr.bf16.mxu0 0
    %659 = vmatpush1.bf16.msra.mxu0 %v582
    %660 = vmatprep.subr.bf16.mxu0 0
    %661 = vmatpush1.bf16.msra.mxu0 %v579
    %662 = vmatprep.subr.bf16.mxu0 0
    %663 = vmatpush1.bf16.msra.mxu0 %v576
    %664 = vmatprep.subr.bf16.mxu0 0
    %665 = vmatpush1.bf16.msra.mxu0 %v573
    %666 = vmatprep.subr.bf16.mxu0 0
    %667 = vmatpush1.bf16.msra.mxu0 %v570
    %668 = vmatprep.subr.bf16.mxu0 0
    %669 = vmatpush1.bf16.msra.mxu0 %v567
    %670 = vmatprep.subr.bf16.mxu0 0
    %671 = vmatpush2.bf16.msra.mxu0 0
    %672 = vmatprep.subr.bf16.mxu0 0
    %673 = vmatpush2.bf16.msra.mxu0 0
    %674 = vmatprep.subr.bf16.mxu0 0
    %675 = vmatpush2.bf16.msra.mxu0 0
    %676 = vmatprep.subr.bf16.mxu0 0
    %677 = vmatpush2.bf16.msra.mxu0 0
    %678 = vmatprep.subr.bf16.mxu0 0
    %679 = vmatpush2.bf16.msra.mxu0 0
    %680 = vmatprep.subr.bf16.mxu0 0
    %681 = vmatpush2.bf16.msra.mxu0 0
    %682 = vmatprep.subr.bf16.mxu0 0
    %683 = vmatpush2.bf16.msra.mxu0 0
    %684 = vmatprep.subr.bf16.mxu0 0
    %685 = vmatpush2.bf16.msra.mxu0 0
    %686 = vmatprep.mubr.bf16.mxu0 0
    %687 = vmatmul.mubr.bf16.gmra.mxu0 0
    %v688 = vpop.f32.mrf.mxu0
    %v689 = vadd.f32 0.0, %v688
    %v690 = vpop.f32.mrf.mxu0
    %v691 = vpop.f32.mrf.mxu0
    %v692 = vpop.f32.mrf.mxu0
    %693 = vdwg.mxu0
    %v694 = vld [vmem:[#allocation2] sm:$0xff]
    %v695 = vld [vmem:[#allocation2 + $0x8] sm:$0xf]
    %v696 = vunpack.c.l.bf16 %v694
    %v697 = vunpack.c.h.bf16 %v694
    %v698 = vunpack.c.l.bf16 %v695
    %v699 = vadd.f32 %v696, %v648
    %v700 = vxor.u32 %v699, 2147483648
    %v701 = vmul.f32 %v700, 1.442695
    %v702 = vpow.pop %v701
    %v703 = vadd.f32 %v702, 1.0
    %v704 = vrcp.pop %v703
    %v705 = vmul.f32 1.0, %v704
    %v706 = vadd.f32 %v697, %v650
    %v707 = vxor.u32 %v706, 2147483648
    %v708 = vmul.f32 %v707, 1.442695
    %v709 = vpow.pop %v708
    %v710 = vadd.f32 %v709, 1.0
    %v711 = vrcp.pop %v710
    %v712 = vmul.f32 1.0, %v711
    %v714 = vlaneseq
    %v715 = vshrl.u32 %v714, 7
    %v716 = vsub.s32 0, %v715
    %v717 = vrot.slane %v482, %v716
    %v719 = vadd.f32 %v689, %v717
    %v720 = vmul.f32 %v705, %v719
    %v721 = vadd.f32 %v698, %v720
    %v722 = vtanh.pop %v721
    %v723 = vsub.f32 1.0, %v712
    %v724 = vmul.f32 %v723, %v722
    %v725 = vmul.f32 %v712, 0.0
    %v726 = vadd.f32 %v724, %v725
    %v727 = vsel %vm484, 1, 0
    %728 = vset.pattern.permute.xlu0 0
    %729 = vperm.xlu0 %728, %v727
    %v730 = vpop.permute.xlu0 %729
    %vm731 = vcmp.eq.s32.totalorder %v730, 1
    %v732 = vsel %vm731, %v726, 0.0
    %v733 = vpack.c.bf16 %v732, %v732
    %734 = vst [vmem:[#allocation3] sm:$0xf] %v733
    %vm735 = vcmp.gt.s32.totalorder %v483, 1
    %736 = vmatprep.subr.bf16.mxu0 %v587
    %737 = vmatpush1.bf16.msra.mxu0 %v586
    %738 = vmatprep.subr.bf16.mxu0 %v584
    %739 = vmatpush1.bf16.msra.mxu0 %v583
    %740 = vmatprep.subr.bf16.mxu0 %v581
    %741 = vmatpush1.bf16.msra.mxu0 %v580
    %742 = vmatprep.subr.bf16.mxu0 %v578
    %743 = vmatpush1.bf16.msra.mxu0 %v577
    %744 = vmatprep.subr.bf16.mxu0 %v575
    %745 = vmatpush1.bf16.msra.mxu0 %v574
    %746 = vmatprep.subr.bf16.mxu0 %v572
    %747 = vmatpush1.bf16.msra.mxu0 %v571
    %748 = vmatprep.subr.bf16.mxu0 %v569
    %749 = vmatpush1.bf16.msra.mxu0 %v568
    %750 = vmatprep.subr.bf16.mxu0 %v566
    %751 = vmatpush1.bf16.msra.mxu0 %v565
    %752 = vmatprep.subr.bf16.mxu0 0
    %753 = vmatpush2.bf16.msra.mxu0 0
    %754 = vmatprep.subr.bf16.mxu0 0
    %755 = vmatpush2.bf16.msra.mxu0 0
    %756 = vmatprep.subr.bf16.mxu0 0
    %757 = vmatpush2.bf16.msra.mxu0 0
    %758 = vmatprep.subr.bf16.mxu0 0
    %759 = vmatpush2.bf16.msra.mxu0 0
    %760 = vmatprep.subr.bf16.mxu0 0
    %761 = vmatpush2.bf16.msra.mxu0 0
    %762 = vmatprep.subr.bf16.mxu0 0
    %763 = vmatpush2.bf16.msra.mxu0 0
    %764 = vmatprep.subr.bf16.mxu0 0
    %765 = vmatpush2.bf16.msra.mxu0 0
    %766 = vmatprep.subr.bf16.mxu0 0
    %767 = vmatpush2.bf16.msra.mxu0 0
    %768 = vmatprep.mubr.bf16.mxu0 0
    %769 = vmatmul.mubr.bf16.gmra.mxu0 %v733
    %v770 = vpop.f32.mrf.mxu0
    %v771 = vadd.f32 0.0, %v770
    %v772 = vpop.f32.mrf.mxu0
    %v773 = vadd.f32 0.0, %v772
    %v774 = vpop.f32.mrf.mxu0
    %v775 = vpop.f32.mrf.mxu0
    %776 = vdwg.mxu0
    %777 = vmatprep.subr.bf16.mxu0 0
    %778 = vmatpush1.bf16.msra.mxu0 %v588
    %779 = vmatprep.subr.bf16.mxu0 0
    %780 = vmatpush1.bf16.msra.mxu0 %v585
    %781 = vmatprep.subr.bf16.mxu0 0
    %782 = vmatpush1.bf16.msra.mxu0 %v582
    %783 = vmatprep.subr.bf16.mxu0 0
    %784 = vmatpush1.bf16.msra.mxu0 %v579
    %785 = vmatprep.subr.bf16.mxu0 0
    %786 = vmatpush1.bf16.msra.mxu0 %v576
    %787 = vmatprep.subr.bf16.mxu0 0
    %788 = vmatpush1.bf16.msra.mxu0 %v573
    %789 = vmatprep.subr.bf16.mxu0 0
    %790 = vmatpush1.bf16.msra.mxu0 %v570
    %791 = vmatprep.subr.bf16.mxu0 0
    %792 = vmatpush1.bf16.msra.mxu0 %v567
    %793 = vmatprep.subr.bf16.mxu0 0
    %794 = vmatpush2.bf16.msra.mxu0 0
    %795 = vmatprep.subr.bf16.mxu0 0
    %796 = vmatpush2.bf16.msra.mxu0 0
    %797 = vmatprep.subr.bf16.mxu0 0
    %798 = vmatpush2.bf16.msra.mxu0 0
    %799 = vmatprep.subr.bf16.mxu0 0
    %800 = vmatpush2.bf16.msra.mxu0 0
    %801 = vmatprep.subr.bf16.mxu0 0
    %802 = vmatpush2.bf16.msra.mxu0 0
    %803 = vmatprep.subr.bf16.mxu0 0
    %804 = vmatpush2.bf16.msra.mxu0 0
    %805 = vmatprep.subr.bf16.mxu0 0
    %806 = vmatpush2.bf16.msra.mxu0 0
    %807 = vmatprep.subr.bf16.mxu0 0
    %808 = vmatpush2.bf16.msra.mxu0 0
    %809 = vmatprep.mubr.bf16.mxu0 0
    %810 = vmatmul.mubr.bf16.gmra.mxu0 %v733
    %v811 = vpop.f32.mrf.mxu0
    %v812 = vadd.f32 0.0, %v811
    %v813 = vpop.f32.mrf.mxu0
    %v814 = vpop.f32.mrf.mxu0
    %v815 = vpop.f32.mrf.mxu0
    %816 = vdwg.mxu0
    %s817 = scalar_lea.vmem [#allocation2], 12
    %v818 = vld [vmem:[%s817] sm:$0xff]
    %v819 = vld [vmem:[%s817 + $0x8] sm:$0xf]
    %v820 = vunpack.c.l.bf16 %v818
    %v821 = vunpack.c.h.bf16 %v818
    %v822 = vunpack.c.l.bf16 %v819
    %v823 = vadd.f32 %v820, %v771
    %v824 = vxor.u32 %v823, 2147483648
    %v825 = vmul.f32 %v824, 1.442695
    %v826 = vpow.pop %v825
    %v827 = vadd.f32 %v826, 1.0
    %v828 = vrcp.pop %v827
    %v829 = vmul.f32 1.0, %v828
    %v830 = vadd.f32 %v821, %v773
    %v831 = vxor.u32 %v830, 2147483648
    %v832 = vmul.f32 %v831, 1.442695
    %v833 = vpow.pop %v832
    %v834 = vadd.f32 %v833, 1.0
    %v835 = vrcp.pop %v834
    %v836 = vmul.f32 1.0, %v835
    %v837 = vadd.f32 %v812, %v717
    %v838 = vmul.f32 %v829, %v837
    %v839 = vadd.f32 %v822, %v838
    %v840 = vtanh.pop %v839
    %v841 = vsub.f32 1.0, %v836
    %v842 = vmul.f32 %v841, %v840
    %v843 = vmul.f32 %v836, %v732
    %v844 = vadd.f32 %v842, %v843
    %v845 = vsel %vm735, 1, 0
    %846 = vset.pattern.permute.xlu0 0
    %847 = vperm.xlu0 %846, %v845
    %v848 = vpop.permute.xlu0 %847
    %vm849 = vcmp.eq.s32.totalorder %v848, 1
    %v850 = vsel %vm849, %v844, %v732
    %v851 = vsel %vm849, %v844, 0.0
    %v852 = vpack.c.bf16 %v851, %v851
    %s853 = scalar_lea.vmem [#allocation3], 4
    %854 = vst [vmem:[%s853] sm:$0xf] %v852
    %vm855 = vcmp.gt.s32.totalorder %v483, 2
    %v856 = vpack.c.bf16 %v850, %v850
    %857 = vmatprep.subr.bf16.mxu0 %v587
    %858 = vmatpush1.bf16.msra.mxu0 %v586
    %859 = vmatprep.subr.bf16.mxu0 %v584
    %860 = vmatpush1.bf16.msra.mxu0 %v583
    %861 = vmatprep.subr.bf16.mxu0 %v581
    %862 = vmatpush1.bf16.msra.mxu0 %v580
    %863 = vmatprep.subr.bf16.mxu0 %v578
    %864 = vmatpush1.bf16.msra.mxu0 %v577
    %865 = vmatprep.subr.bf16.mxu0 %v575
    %866 = vmatpush1.bf16.msra.mxu0 %v574
    %867 = vmatprep.subr.bf16.mxu0 %v572
    %868 = vmatpush1.bf16.msra.mxu0 %v571
    %869 = vmatprep.subr.bf16.mxu0 %v569
    %870 = vmatpush1.bf16.msra.mxu0 %v568
    %871 = vmatprep.subr.bf16.mxu0 %v566
    %872 = vmatpush1.bf16.msra.mxu0 %v565
    %873 = vmatprep.subr.bf16.mxu0 0
    %874 = vmatpush2.bf16.msra.mxu0 0
    %875 = vmatprep.subr.bf16.mxu0 0
    %876 = vmatpush2.bf16.msra.mxu0 0
    %877 = vmatprep.subr.bf16.mxu0 0
    %878 = vmatpush2.bf16.msra.mxu0 0
    %879 = vmatprep.subr.bf16.mxu0 0
    %880 = vmatpush2.bf16.msra.mxu0 0
    %881 = vmatprep.subr.bf16.mxu0 0
    %882 = vmatpush2.bf16.msra.mxu0 0
    %883 = vmatprep.subr.bf16.mxu0 0
    %884 = vmatpush2.bf16.msra.mxu0 0
    %885 = vmatprep.subr.bf16.mxu0 0
    %886 = vmatpush2.bf16.msra.mxu0 0
    %887 = vmatprep.subr.bf16.mxu0 0
    %888 = vmatpush2.bf16.msra.mxu0 0
    %889 = vmatprep.mubr.bf16.mxu0 0
    %890 = vmatmul.mubr.bf16.gmra.mxu0 %v856
    %v891 = vpop.f32.mrf.mxu0
    %v892 = vadd.f32 0.0, %v891
    %v893 = vpop.f32.mrf.mxu0
    %v894 = vadd.f32 0.0, %v893
    %v895 = vpop.f32.mrf.mxu0
    %v896 = vpop.f32.mrf.mxu0
    %897 = vdwg.mxu0
    %898 = vmatprep.subr.bf16.mxu0 0
    %899 = vmatpush1.bf16.msra.mxu0 %v588
    %900 = vmatprep.subr.bf16.mxu0 0
    %901 = vmatpush1.bf16.msra.mxu0 %v585
    %902 = vmatprep.subr.bf16.mxu0 0
    %903 = vmatpush1.bf16.msra.mxu0 %v582
    %904 = vmatprep.subr.bf16.mxu0 0
    %905 = vmatpush1.bf16.msra.mxu0 %v579
    %906 = vmatprep.subr.bf16.mxu0 0
    %907 = vmatpush1.bf16.msra.mxu0 %v576
    %908 = vmatprep.subr.bf16.mxu0 0
    %909 = vmatpush1.bf16.msra.mxu0 %v573
    %910 = vmatprep.subr.bf16.mxu0 0
    %911 = vmatpush1.bf16.msra.mxu0 %v570
    %912 = vmatprep.subr.bf16.mxu0 0
    %913 = vmatpush1.bf16.msra.mxu0 %v567
    %914 = vmatprep.subr.bf16.mxu0 0
    %915 = vmatpush2.bf16.msra.mxu0 0
    %916 = vmatprep.subr.bf16.mxu0 0
    %917 = vmatpush2.bf16.msra.mxu0 0
    %918 = vmatprep.subr.bf16.mxu0 0
    %919 = vmatpush2.bf16.msra.mxu0 0
    %920 = vmatprep.subr.bf16.mxu0 0
    %921 = vmatpush2.bf16.msra.mxu0 0
    %922 = vmatprep.subr.bf16.mxu0 0
    %923 = vmatpush2.bf16.msra.mxu0 0
    %924 = vmatprep.subr.bf16.mxu0 0
    %925 = vmatpush2.bf16.msra.mxu0 0
    %926 = vmatprep.subr.bf16.mxu0 0
    %927 = vmatpush2.bf16.msra.mxu0 0
    %928 = vmatprep.subr.bf16.mxu0 0
    %929 = vmatpush2.bf16.msra.mxu0 0
    %930 = vmatprep.mubr.bf16.mxu0 0
    %931 = vmatmul.mubr.bf16.gmra.mxu0 %v856
    %v932 = vpop.f32.mrf.mxu0
    %v933 = vadd.f32 0.0, %v932
    %v934 = vpop.f32.mrf.mxu0
    %v935 = vpop.f32.mrf.mxu0
    %v936 = vpop.f32.mrf.mxu0
    %937 = vdwg.mxu0
    %s938 = scalar_lea.vmem [#allocation2], 24
    %v939 = vld [vmem:[%s938] sm:$0xff]
    %v940 = vld [vmem:[%s938 + $0x8] sm:$0xf]
    %v941 = vunpack.c.l.bf16 %v939
    %v942 = vunpack.c.h.bf16 %v939
    %v943 = vunpack.c.l.bf16 %v940
    %v944 = vadd.f32 %v941, %v892
    %v945 = vxor.u32 %v944, 2147483648
    %v946 = vmul.f32 %v945, 1.442695
    %v947 = vpow.pop %v946
    %v948 = vadd.f32 %v947, 1.0
    %v949 = vrcp.pop %v948
    %v950 = vmul.f32 1.0, %v949
    %v951 = vadd.f32 %v942, %v894
    %v952 = vxor.u32 %v951, 2147483648
    %v953 = vmul.f32 %v952, 1.442695
    %v954 = vpow.pop %v953
    %v955 = vadd.f32 %v954, 1.0
    %v956 = vrcp.pop %v955
    %v957 = vmul.f32 1.0, %v956
    %v958 = vadd.f32 %v933, %v717
    %v959 = vmul.f32 %v950, %v958
    %v960 = vadd.f32 %v943, %v959
    %v961 = vtanh.pop %v960
    %v962 = vsub.f32 1.0, %v957
    %v963 = vmul.f32 %v962, %v961
    %v964 = vmul.f32 %v957, %v850
    %v965 = vadd.f32 %v963, %v964
    %v966 = vsel %vm855, 1, 0
    %967 = vset.pattern.permute.xlu0 0
    %968 = vperm.xlu0 %967, %v966
    %v969 = vpop.permute.xlu0 %968
    %vm970 = vcmp.eq.s32.totalorder %v969, 1
    %v971 = vsel %vm970, %v965, %v850
    %v972 = vsel %vm970, %v965, 0.0
    %v973 = vpack.c.bf16 %v972, %v972
    %s974 = scalar_lea.vmem [#allocation3], 8
    %975 = vst [vmem:[%s974] sm:$0xf] %v973
    %vm976 = vcmp.gt.s32.totalorder %v483, 3
    %v977 = vpack.c.bf16 %v971, %v971
    %978 = vmatprep.subr.bf16.mxu0 %v587
    %979 = vmatpush1.bf16.msra.mxu0 %v586
    %980 = vmatprep.subr.bf16.mxu0 %v584
    %981 = vmatpush1.bf16.msra.mxu0 %v583
    %982 = vmatprep.subr.bf16.mxu0 %v581
    %983 = vmatpush1.bf16.msra.mxu0 %v580
    %984 = vmatprep.subr.bf16.mxu0 %v578
    %985 = vmatpush1.bf16.msra.mxu0 %v577
    %986 = vmatprep.subr.bf16.mxu0 %v575
    %987 = vmatpush1.bf16.msra.mxu0 %v574
    %988 = vmatprep.subr.bf16.mxu0 %v572
    %989 = vmatpush1.bf16.msra.mxu0 %v571
    %990 = vmatprep.subr.bf16.mxu0 %v569
    %991 = vmatpush1.bf16.msra.mxu0 %v568
    %992 = vmatprep.subr.bf16.mxu0 %v566
    %993 = vmatpush1.bf16.msra.mxu0 %v565
    %994 = vmatprep.subr.bf16.mxu0 0
    %995 = vmatpush2.bf16.msra.mxu0 0
    %996 = vmatprep.subr.bf16.mxu0 0
    %997 = vmatpush2.bf16.msra.mxu0 0
    %998 = vmatprep.subr.bf16.mxu0 0
    %999 = vmatpush2.bf16.msra.mxu0 0
    %1000 = vmatprep.subr.bf16.mxu0 0
    %1001 = vmatpush2.bf16.msra.mxu0 0
    %1002 = vmatprep.subr.bf16.mxu0 0
    %1003 = vmatpush2.bf16.msra.mxu0 0
    %1004 = vmatprep.subr.bf16.mxu0 0
    %1005 = vmatpush2.bf16.msra.mxu0 0
    %1006 = vmatprep.subr.bf16.mxu0 0
    %1007 = vmatpush2.bf16.msra.mxu0 0
    %1008 = vmatprep.subr.bf16.mxu0 0
    %1009 = vmatpush2.bf16.msra.mxu0 0
    %1010 = vmatprep.mubr.bf16.mxu0 0
    %1011 = vmatmul.mubr.bf16.gmra.mxu0 %v977
    %v1012 = vpop.f32.mrf.mxu0
    %v1013 = vadd.f32 0.0, %v1012
    %v1014 = vpop.f32.mrf.mxu0
    %v1015 = vadd.f32 0.0, %v1014
    %v1016 = vpop.f32.mrf.mxu0
    %v1017 = vpop.f32.mrf.mxu0
    %1018 = vdwg.mxu0
    %1019 = vmatprep.subr.bf16.mxu0 0
    %1020 = vmatpush1.bf16.msra.mxu0 %v588
    %1021 = vmatprep.subr.bf16.mxu0 0
    %1022 = vmatpush1.bf16.msra.mxu0 %v585
    %1023 = vmatprep.subr.bf16.mxu0 0
    %1024 = vmatpush1.bf16.msra.mxu0 %v582
    %1025 = vmatprep.subr.bf16.mxu0 0
    %1026 = vmatpush1.bf16.msra.mxu0 %v579
    %1027 = vmatprep.subr.bf16.mxu0 0
    %1028 = vmatpush1.bf16.msra.mxu0 %v576
    %1029 = vmatprep.subr.bf16.mxu0 0
    %1030 = vmatpush1.bf16.msra.mxu0 %v573
    %1031 = vmatprep.subr.bf16.mxu0 0
    %1032 = vmatpush1.bf16.msra.mxu0 %v570
    %1033 = vmatprep.subr.bf16.mxu0 0
    %1034 = vmatpush1.bf16.msra.mxu0 %v567
    %1035 = vmatprep.subr.bf16.mxu0 0
    %1036 = vmatpush2.bf16.msra.mxu0 0
    %1037 = vmatprep.subr.bf16.mxu0 0
    %1038 = vmatpush2.bf16.msra.mxu0 0
    %1039 = vmatprep.subr.bf16.mxu0 0
    %1040 = vmatpush2.bf16.msra.mxu0 0
    %1041 = vmatprep.subr.bf16.mxu0 0
    %1042 = vmatpush2.bf16.msra.mxu0 0
    %1043 = vmatprep.subr.bf16.mxu0 0
    %1044 = vmatpush2.bf16.msra.mxu0 0
    %1045 = vmatprep.subr.bf16.mxu0 0
    %1046 = vmatpush2.bf16.msra.mxu0 0
    %1047 = vmatprep.subr.bf16.mxu0 0
    %1048 = vmatpush2.bf16.msra.mxu0 0
    %1049 = vmatprep.subr.bf16.mxu0 0
    %1050 = vmatpush2.bf16.msra.mxu0 0
    %1051 = vmatprep.mubr.bf16.mxu0 0
    %1052 = vmatmul.mubr.bf16.gmra.mxu0 %v977
    %v1053 = vpop.f32.mrf.mxu0
    %v1054 = vadd.f32 0.0, %v1053
    %v1055 = vpop.f32.mrf.mxu0
    %v1056 = vpop.f32.mrf.mxu0
    %v1057 = vpop.f32.mrf.mxu0
    %1058 = vdwg.mxu0
    %s1059 = scalar_lea.vmem [#allocation2], 36
    %v1060 = vld [vmem:[%s1059] sm:$0xff]
    %v1061 = vld [vmem:[%s1059 + $0x8] sm:$0xf]
    %v1062 = vunpack.c.l.bf16 %v1060
    %v1063 = vunpack.c.h.bf16 %v1060
    %v1064 = vunpack.c.l.bf16 %v1061
    %v1065 = vadd.f32 %v1062, %v1013
    %v1066 = vxor.u32 %v1065, 2147483648
    %v1067 = vmul.f32 %v1066, 1.442695
    %v1068 = vpow.pop %v1067
    %v1069 = vadd.f32 %v1068, 1.0
    %v1070 = vrcp.pop %v1069
    %v1071 = vmul.f32 1.0, %v1070
    %v1072 = vadd.f32 %v1063, %v1015
    %v1073 = vxor.u32 %v1072, 2147483648
    %v1074 = vmul.f32 %v1073, 1.442695
    %v1075 = vpow.pop %v1074
    %v1076 = vadd.f32 %v1075, 1.0
    %v1077 = vrcp.pop %v1076
    %v1078 = vmul.f32 1.0, %v1077
    %v1079 = vadd.f32 %v1054, %v717
    %v1080 = vmul.f32 %v1071, %v1079
    %v1081 = vadd.f32 %v1064, %v1080
    %v1082 = vtanh.pop %v1081
    %v1083 = vsub.f32 1.0, %v1078
    %v1084 = vmul.f32 %v1083, %v1082
    %v1085 = vmul.f32 %v1078, %v971
    %v1086 = vadd.f32 %v1084, %v1085
    %v1087 = vsel %vm976, 1, 0
    %1088 = vset.pattern.permute.xlu0 0
    %1089 = vperm.xlu0 %1088, %v1087
    %v1090 = vpop.permute.xlu0 %1089
    %vm1091 = vcmp.eq.s32.totalorder %v1090, 1
    %v1092 = vsel %vm1091, %v1086, %v971
    %v1093 = vsel %vm1091, %v1086, 0.0
    %v1094 = vpack.c.bf16 %v1093, %v1093
    %s1095 = scalar_lea.vmem [#allocation3], 12
    %1096 = vst [vmem:[%s1095] sm:$0xf] %v1094
    %vm1097 = vcmp.gt.s32.totalorder %v483, 4
    %v1098 = vpack.c.bf16 %v1092, %v1092
    %1099 = vmatprep.subr.bf16.mxu0 %v587
    %1100 = vmatpush1.bf16.msra.mxu0 %v586
    %1101 = vmatprep.subr.bf16.mxu0 %v584
    %1102 = vmatpush1.bf16.msra.mxu0 %v583
    %1103 = vmatprep.subr.bf16.mxu0 %v581
    %1104 = vmatpush1.bf16.msra.mxu0 %v580
    %1105 = vmatprep.subr.bf16.mxu0 %v578
    %1106 = vmatpush1.bf16.msra.mxu0 %v577
    %1107 = vmatprep.subr.bf16.mxu0 %v575
    %1108 = vmatpush1.bf16.msra.mxu0 %v574
    %1109 = vmatprep.subr.bf16.mxu0 %v572
    %1110 = vmatpush1.bf16.msra.mxu0 %v571
    %1111 = vmatprep.subr.bf16.mxu0 %v569
    %1112 = vmatpush1.bf16.msra.mxu0 %v568
    %1113 = vmatprep.subr.bf16.mxu0 %v566
    %1114 = vmatpush1.bf16.msra.mxu0 %v565
    %1115 = vmatprep.subr.bf16.mxu0 0
    %1116 = vmatpush2.bf16.msra.mxu0 0
    %1117 = vmatprep.subr.bf16.mxu0 0
    %1118 = vmatpush2.bf16.msra.mxu0 0
    %1119 = vmatprep.subr.bf16.mxu0 0
    %1120 = vmatpush2.bf16.msra.mxu0 0
    %1121 = vmatprep.subr.bf16.mxu0 0
    %1122 = vmatpush2.bf16.msra.mxu0 0
    %1123 = vmatprep.subr.bf16.mxu0 0
    %1124 = vmatpush2.bf16.msra.mxu0 0
    %1125 = vmatprep.subr.bf16.mxu0 0
    %1126 = vmatpush2.bf16.msra.mxu0 0
    %1127 = vmatprep.subr.bf16.mxu0 0
    %1128 = vmatpush2.bf16.msra.mxu0 0
    %1129 = vmatprep.subr.bf16.mxu0 0
    %1130 = vmatpush2.bf16.msra.mxu0 0
    %1131 = vmatprep.mubr.bf16.mxu0 0
    %1132 = vmatmul.mubr.bf16.gmra.mxu0 %v1098
    %v1133 = vpop.f32.mrf.mxu0
    %v1134 = vadd.f32 0.0, %v1133
    %v1135 = vpop.f32.mrf.mxu0
    %v1136 = vadd.f32 0.0, %v1135
    %v1137 = vpop.f32.mrf.mxu0
    %v1138 = vpop.f32.mrf.mxu0
    %1139 = vdwg.mxu0
    %1140 = vmatprep.subr.bf16.mxu0 0
    %1141 = vmatpush1.bf16.msra.mxu0 %v588
    %1142 = vmatprep.subr.bf16.mxu0 0
    %1143 = vmatpush1.bf16.msra.mxu0 %v585
    %1144 = vmatprep.subr.bf16.mxu0 0
    %1145 = vmatpush1.bf16.msra.mxu0 %v582
    %1146 = vmatprep.subr.bf16.mxu0 0
    %1147 = vmatpush1.bf16.msra.mxu0 %v579
    %1148 = vmatprep.subr.bf16.mxu0 0
    %1149 = vmatpush1.bf16.msra.mxu0 %v576
    %1150 = vmatprep.subr.bf16.mxu0 0
    %1151 = vmatpush1.bf16.msra.mxu0 %v573
    %1152 = vmatprep.subr.bf16.mxu0 0
    %1153 = vmatpush1.bf16.msra.mxu0 %v570
    %1154 = vmatprep.subr.bf16.mxu0 0
    %1155 = vmatpush1.bf16.msra.mxu0 %v567
    %1156 = vmatprep.subr.bf16.mxu0 0
    %1157 = vmatpush2.bf16.msra.mxu0 0
    %1158 = vmatprep.subr.bf16.mxu0 0
    %1159 = vmatpush2.bf16.msra.mxu0 0
    %1160 = vmatprep.subr.bf16.mxu0 0
    %1161 = vmatpush2.bf16.msra.mxu0 0
    %1162 = vmatprep.subr.bf16.mxu0 0
    %1163 = vmatpush2.bf16.msra.mxu0 0
    %1164 = vmatprep.subr.bf16.mxu0 0
    %1165 = vmatpush2.bf16.msra.mxu0 0
    %1166 = vmatprep.subr.bf16.mxu0 0
    %1167 = vmatpush2.bf16.msra.mxu0 0
    %1168 = vmatprep.subr.bf16.mxu0 0
    %1169 = vmatpush2.bf16.msra.mxu0 0
    %1170 = vmatprep.subr.bf16.mxu0 0
    %1171 = vmatpush2.bf16.msra.mxu0 0
    %1172 = vmatprep.mubr.bf16.mxu0 0
    %1173 = vmatmul.mubr.bf16.gmra.mxu0 %v1098
    %v1174 = vpop.f32.mrf.mxu0
    %v1175 = vadd.f32 0.0, %v1174
    %v1176 = vpop.f32.mrf.mxu0
    %v1177 = vpop.f32.mrf.mxu0
    %v1178 = vpop.f32.mrf.mxu0
    %1179 = vdwg.mxu0
    %s1180 = scalar_lea.vmem [#allocation2], 48
    %v1181 = vld [vmem:[%s1180] sm:$0xff]
    %v1182 = vld [vmem:[%s1180 + $0x8] sm:$0xf]
    %v1183 = vunpack.c.l.bf16 %v1181
    %v1184 = vunpack.c.h.bf16 %v1181
    %v1185 = vunpack.c.l.bf16 %v1182
    %v1186 = vadd.f32 %v1183, %v1134
    %v1187 = vxor.u32 %v1186, 2147483648
    %v1188 = vmul.f32 %v1187, 1.442695
    %v1189 = vpow.pop %v1188
    %v1190 = vadd.f32 %v1189, 1.0
    %v1191 = vrcp.pop %v1190
    %v1192 = vmul.f32 1.0, %v1191
    %v1193 = vadd.f32 %v1184, %v1136
    %v1194 = vxor.u32 %v1193, 2147483648
    %v1195 = vmul.f32 %v1194, 1.442695
    %v1196 = vpow.pop %v1195
    %v1197 = vadd.f32 %v1196, 1.0
    %v1198 = vrcp.pop %v1197
    %v1199 = vmul.f32 1.0, %v1198
    %v1200 = vadd.f32 %v1175, %v717
    %v1201 = vmul.f32 %v1192, %v1200
    %v1202 = vadd.f32 %v1185, %v1201
    %v1203 = vtanh.pop %v1202
    %v1204 = vsub.f32 1.0, %v1199
    %v1205 = vmul.f32 %v1204, %v1203
    %v1206 = vmul.f32 %v1199, %v1092
    %v1207 = vadd.f32 %v1205, %v1206
    %v1208 = vsel %vm1097, 1, 0
    %1209 = vset.pattern.permute.xlu0 0
    %1210 = vperm.xlu0 %1209, %v1208
    %v1211 = vpop.permute.xlu0 %1210
    %vm1212 = vcmp.eq.s32.totalorder %v1211, 1
    %v1213 = vsel %vm1212, %v1207, %v1092
    %v1214 = vsel %vm1212, %v1207, 0.0
    %v1215 = vpack.c.bf16 %v1214, %v1214
    %s1216 = scalar_lea.vmem [#allocation3], 16
    %1217 = vst [vmem:[%s1216] sm:$0xf] %v1215
    %vm1218 = vcmp.gt.s32.totalorder %v483, 5
    %v1219 = vpack.c.bf16 %v1213, %v1213
    %1220 = vmatprep.subr.bf16.mxu0 %v587
    %1221 = vmatpush1.bf16.msra.mxu0 %v586
    %1222 = vmatprep.subr.bf16.mxu0 %v584
    %1223 = vmatpush1.bf16.msra.mxu0 %v583
    %1224 = vmatprep.subr.bf16.mxu0 %v581
    %1225 = vmatpush1.bf16.msra.mxu0 %v580
    %1226 = vmatprep.subr.bf16.mxu0 %v578
    %1227 = vmatpush1.bf16.msra.mxu0 %v577
    %1228 = vmatprep.subr.bf16.mxu0 %v575
    %1229 = vmatpush1.bf16.msra.mxu0 %v574
    %1230 = vmatprep.subr.bf16.mxu0 %v572
    %1231 = vmatpush1.bf16.msra.mxu0 %v571
    %1232 = vmatprep.subr.bf16.mxu0 %v569
    %1233 = vmatpush1.bf16.msra.mxu0 %v568
    %1234 = vmatprep.subr.bf16.mxu0 %v566
    %1235 = vmatpush1.bf16.msra.mxu0 %v565
    %1236 = vmatprep.subr.bf16.mxu0 0
    %1237 = vmatpush2.bf16.msra.mxu0 0
    %1238 = vmatprep.subr.bf16.mxu0 0
    %1239 = vmatpush2.bf16.msra.mxu0 0
    %1240 = vmatprep.subr.bf16.mxu0 0
    %1241 = vmatpush2.bf16.msra.mxu0 0
    %1242 = vmatprep.subr.bf16.mxu0 0
    %1243 = vmatpush2.bf16.msra.mxu0 0
    %1244 = vmatprep.subr.bf16.mxu0 0
    %1245 = vmatpush2.bf16.msra.mxu0 0
    %1246 = vmatprep.subr.bf16.mxu0 0
    %1247 = vmatpush2.bf16.msra.mxu0 0
    %1248 = vmatprep.subr.bf16.mxu0 0
    %1249 = vmatpush2.bf16.msra.mxu0 0
    %1250 = vmatprep.subr.bf16.mxu0 0
    %1251 = vmatpush2.bf16.msra.mxu0 0
    %1252 = vmatprep.mubr.bf16.mxu0 0
    %1253 = vmatmul.mubr.bf16.gmra.mxu0 %v1219
    %v1254 = vpop.f32.mrf.mxu0
    %v1255 = vadd.f32 0.0, %v1254
    %v1256 = vpop.f32.mrf.mxu0
    %v1257 = vadd.f32 0.0, %v1256
    %v1258 = vpop.f32.mrf.mxu0
    %v1259 = vpop.f32.mrf.mxu0
    %1260 = vdwg.mxu0
    %1261 = vmatprep.subr.bf16.mxu0 0
    %1262 = vmatpush1.bf16.msra.mxu0 %v588
    %1263 = vmatprep.subr.bf16.mxu0 0
    %1264 = vmatpush1.bf16.msra.mxu0 %v585
    %1265 = vmatprep.subr.bf16.mxu0 0
    %1266 = vmatpush1.bf16.msra.mxu0 %v582
    %1267 = vmatprep.subr.bf16.mxu0 0
    %1268 = vmatpush1.bf16.msra.mxu0 %v579
    %1269 = vmatprep.subr.bf16.mxu0 0
    %1270 = vmatpush1.bf16.msra.mxu0 %v576
    %1271 = vmatprep.subr.bf16.mxu0 0
    %1272 = vmatpush1.bf16.msra.mxu0 %v573
    %1273 = vmatprep.subr.bf16.mxu0 0
    %1274 = vmatpush1.bf16.msra.mxu0 %v570
    %1275 = vmatprep.subr.bf16.mxu0 0
    %1276 = vmatpush1.bf16.msra.mxu0 %v567
    %1277 = vmatprep.subr.bf16.mxu0 0
    %1278 = vmatpush2.bf16.msra.mxu0 0
    %1279 = vmatprep.subr.bf16.mxu0 0
    %1280 = vmatpush2.bf16.msra.mxu0 0
    %1281 = vmatprep.subr.bf16.mxu0 0
    %1282 = vmatpush2.bf16.msra.mxu0 0
    %1283 = vmatprep.subr.bf16.mxu0 0
    %1284 = vmatpush2.bf16.msra.mxu0 0
    %1285 = vmatprep.subr.bf16.mxu0 0
    %1286 = vmatpush2.bf16.msra.mxu0 0
    %1287 = vmatprep.subr.bf16.mxu0 0
    %1288 = vmatpush2.bf16.msra.mxu0 0
    %1289 = vmatprep.subr.bf16.mxu0 0
    %1290 = vmatpush2.bf16.msra.mxu0 0
    %1291 = vmatprep.subr.bf16.mxu0 0
    %1292 = vmatpush2.bf16.msra.mxu0 0
    %1293 = vmatprep.mubr.bf16.mxu0 0
    %1294 = vmatmul.mubr.bf16.gmra.mxu0 %v1219
    %v1295 = vpop.f32.mrf.mxu0
    %v1296 = vadd.f32 0.0, %v1295
    %v1297 = vpop.f32.mrf.mxu0
    %v1298 = vpop.f32.mrf.mxu0
    %v1299 = vpop.f32.mrf.mxu0
    %1300 = vdwg.mxu0
    %s1301 = scalar_lea.vmem [#allocation2], 60
    %v1302 = vld [vmem:[%s1301] sm:$0xff]
    %v1303 = vld [vmem:[%s1301 + $0x8] sm:$0xf]
    %v1304 = vunpack.c.l.bf16 %v1302
    %v1305 = vunpack.c.h.bf16 %v1302
    %v1306 = vunpack.c.l.bf16 %v1303
    %v1307 = vadd.f32 %v1304, %v1255
    %v1308 = vxor.u32 %v1307, 2147483648
    %v1309 = vmul.f32 %v1308, 1.442695
    %v1310 = vpow.pop %v1309
    %v1311 = vadd.f32 %v1310, 1.0
    %v1312 = vrcp.pop %v1311
    %v1313 = vmul.f32 1.0, %v1312
    %v1314 = vadd.f32 %v1305, %v1257
    %v1315 = vxor.u32 %v1314, 2147483648
    %v1316 = vmul.f32 %v1315, 1.442695
    %v1317 = vpow.pop %v1316
    %v1318 = vadd.f32 %v1317, 1.0
    %v1319 = vrcp.pop %v1318
    %v1320 = vmul.f32 1.0, %v1319
    %v1321 = vadd.f32 %v1296, %v717
    %v1322 = vmul.f32 %v1313, %v1321
    %v1323 = vadd.f32 %v1306, %v1322
    %v1324 = vtanh.pop %v1323
    %v1325 = vsub.f32 1.0, %v1320
    %v1326 = vmul.f32 %v1325, %v1324
    %v1327 = vmul.f32 %v1320, %v1213
    %v1328 = vadd.f32 %v1326, %v1327
    %v1329 = vsel %vm1218, 1, 0
    %1330 = vset.pattern.permute.xlu0 0
    %1331 = vperm.xlu0 %1330, %v1329
    %v1332 = vpop.permute.xlu0 %1331
    %vm1333 = vcmp.eq.s32.totalorder %v1332, 1
    %v1334 = vsel %vm1333, %v1328, %v1213
    %v1335 = vsel %vm1333, %v1328, 0.0
    %v1336 = vpack.c.bf16 %v1335, %v1335
    %s1337 = scalar_lea.vmem [#allocation3], 20
    %1338 = vst [vmem:[%s1337] sm:$0xf] %v1336
    %vm1339 = vcmp.gt.s32.totalorder %v483, 6
    %v1340 = vpack.c.bf16 %v1334, %v1334
    %1341 = vmatprep.subr.bf16.mxu0 %v587
    %1342 = vmatpush1.bf16.msra.mxu0 %v586
    %1343 = vmatprep.subr.bf16.mxu0 %v584
    %1344 = vmatpush1.bf16.msra.mxu0 %v583
    %1345 = vmatprep.subr.bf16.mxu0 %v581
    %1346 = vmatpush1.bf16.msra.mxu0 %v580
    %1347 = vmatprep.subr.bf16.mxu0 %v578
    %1348 = vmatpush1.bf16.msra.mxu0 %v577
    %1349 = vmatprep.subr.bf16.mxu0 %v575
    %1350 = vmatpush1.bf16.msra.mxu0 %v574
    %1351 = vmatprep.subr.bf16.mxu0 %v572
    %1352 = vmatpush1.bf16.msra.mxu0 %v571
    %1353 = vmatprep.subr.bf16.mxu0 %v569
    %1354 = vmatpush1.bf16.msra.mxu0 %v568
    %1355 = vmatprep.subr.bf16.mxu0 %v566
    %1356 = vmatpush1.bf16.msra.mxu0 %v565
    %1357 = vmatprep.subr.bf16.mxu0 0
    %1358 = vmatpush2.bf16.msra.mxu0 0
    %1359 = vmatprep.subr.bf16.mxu0 0
    %1360 = vmatpush2.bf16.msra.mxu0 0
    %1361 = vmatprep.subr.bf16.mxu0 0
    %1362 = vmatpush2.bf16.msra.mxu0 0
    %1363 = vmatprep.subr.bf16.mxu0 0
    %1364 = vmatpush2.bf16.msra.mxu0 0
    %1365 = vmatprep.subr.bf16.mxu0 0
    %1366 = vmatpush2.bf16.msra.mxu0 0
    %1367 = vmatprep.subr.bf16.mxu0 0
    %1368 = vmatpush2.bf16.msra.mxu0 0
    %1369 = vmatprep.subr.bf16.mxu0 0
    %1370 = vmatpush2.bf16.msra.mxu0 0
    %1371 = vmatprep.subr.bf16.mxu0 0
    %1372 = vmatpush2.bf16.msra.mxu0 0
    %1373 = vmatprep.mubr.bf16.mxu0 0
    %1374 = vmatmul.mubr.bf16.gmra.mxu0 %v1340
    %v1375 = vpop.f32.mrf.mxu0
    %v1376 = vadd.f32 0.0, %v1375
    %v1377 = vpop.f32.mrf.mxu0
    %v1378 = vadd.f32 0.0, %v1377
    %v1379 = vpop.f32.mrf.mxu0
    %v1380 = vpop.f32.mrf.mxu0
    %1381 = vdwg.mxu0
    %1382 = vmatprep.subr.bf16.mxu0 0
    %1383 = vmatpush1.bf16.msra.mxu0 %v588
    %1384 = vmatprep.subr.bf16.mxu0 0
    %1385 = vmatpush1.bf16.msra.mxu0 %v585
    %1386 = vmatprep.subr.bf16.mxu0 0
    %1387 = vmatpush1.bf16.msra.mxu0 %v582
    %1388 = vmatprep.subr.bf16.mxu0 0
    %1389 = vmatpush1.bf16.msra.mxu0 %v579
    %1390 = vmatprep.subr.bf16.mxu0 0
    %1391 = vmatpush1.bf16.msra.mxu0 %v576
    %1392 = vmatprep.subr.bf16.mxu0 0
    %1393 = vmatpush1.bf16.msra.mxu0 %v573
    %1394 = vmatprep.subr.bf16.mxu0 0
    %1395 = vmatpush1.bf16.msra.mxu0 %v570
    %1396 = vmatprep.subr.bf16.mxu0 0
    %1397 = vmatpush1.bf16.msra.mxu0 %v567
    %1398 = vmatprep.subr.bf16.mxu0 0
    %1399 = vmatpush2.bf16.msra.mxu0 0
    %1400 = vmatprep.subr.bf16.mxu0 0
    %1401 = vmatpush2.bf16.msra.mxu0 0
    %1402 = vmatprep.subr.bf16.mxu0 0
    %1403 = vmatpush2.bf16.msra.mxu0 0
    %1404 = vmatprep.subr.bf16.mxu0 0
    %1405 = vmatpush2.bf16.msra.mxu0 0
    %1406 = vmatprep.subr.bf16.mxu0 0
    %1407 = vmatpush2.bf16.msra.mxu0 0
    %1408 = vmatprep.subr.bf16.mxu0 0
    %1409 = vmatpush2.bf16.msra.mxu0 0
    %1410 = vmatprep.subr.bf16.mxu0 0
    %1411 = vmatpush2.bf16.msra.mxu0 0
    %1412 = vmatprep.subr.bf16.mxu0 0
    %1413 = vmatpush2.bf16.msra.mxu0 0
    %1414 = vmatprep.mubr.bf16.mxu0 0
    %1415 = vmatmul.mubr.bf16.gmra.mxu0 %v1340
    %v1416 = vpop.f32.mrf.mxu0
    %v1417 = vadd.f32 0.0, %v1416
    %v1418 = vpop.f32.mrf.mxu0
    %v1419 = vpop.f32.mrf.mxu0
    %v1420 = vpop.f32.mrf.mxu0
    %1421 = vdwg.mxu0
    %s1422 = scalar_lea.vmem [#allocation2], 72
    %v1423 = vld [vmem:[%s1422] sm:$0xff]
    %v1424 = vld [vmem:[%s1422 + $0x8] sm:$0xf]
    %v1425 = vunpack.c.l.bf16 %v1423
    %v1426 = vunpack.c.h.bf16 %v1423
    %v1427 = vunpack.c.l.bf16 %v1424
    %v1428 = vadd.f32 %v1425, %v1376
    %v1429 = vxor.u32 %v1428, 2147483648
    %v1430 = vmul.f32 %v1429, 1.442695
    %v1431 = vpow.pop %v1430
    %v1432 = vadd.f32 %v1431, 1.0
    %v1433 = vrcp.pop %v1432
    %v1434 = vmul.f32 1.0, %v1433
    %v1435 = vadd.f32 %v1426, %v1378
    %v1436 = vxor.u32 %v1435, 2147483648
    %v1437 = vmul.f32 %v1436, 1.442695
    %v1438 = vpow.pop %v1437
    %v1439 = vadd.f32 %v1438, 1.0
    %v1440 = vrcp.pop %v1439
    %v1441 = vmul.f32 1.0, %v1440
    %v1442 = vadd.f32 %v1417, %v717
    %v1443 = vmul.f32 %v1434, %v1442
    %v1444 = vadd.f32 %v1427, %v1443
    %v1445 = vtanh.pop %v1444
    %v1446 = vsub.f32 1.0, %v1441
    %v1447 = vmul.f32 %v1446, %v1445
    %v1448 = vmul.f32 %v1441, %v1334
    %v1449 = vadd.f32 %v1447, %v1448
    %v1450 = vsel %vm1339, 1, 0
    %1451 = vset.pattern.permute.xlu0 0
    %1452 = vperm.xlu0 %1451, %v1450
    %v1453 = vpop.permute.xlu0 %1452
    %vm1454 = vcmp.eq.s32.totalorder %v1453, 1
    %v1455 = vsel %vm1454, %v1449, %v1334
    %v1456 = vsel %vm1454, %v1449, 0.0
    %v1457 = vpack.c.bf16 %v1456, %v1456
    %s1458 = scalar_lea.vmem [#allocation3], 24
    %1459 = vst [vmem:[%s1458] sm:$0xf] %v1457
    %vm1460 = vcmp.gt.s32.totalorder %v483, 7
    %v1461 = vpack.c.bf16 %v1455, %v1455
    %1462 = vmatprep.subr.bf16.mxu0 %v587
    %1463 = vmatpush1.bf16.msra.mxu0 %v586
    %1464 = vmatprep.subr.bf16.mxu0 %v584
    %1465 = vmatpush1.bf16.msra.mxu0 %v583
    %1466 = vmatprep.subr.bf16.mxu0 %v581
    %1467 = vmatpush1.bf16.msra.mxu0 %v580
    %1468 = vmatprep.subr.bf16.mxu0 %v578
    %1469 = vmatpush1.bf16.msra.mxu0 %v577
    %1470 = vmatprep.subr.bf16.mxu0 %v575
    %1471 = vmatpush1.bf16.msra.mxu0 %v574
    %1472 = vmatprep.subr.bf16.mxu0 %v572
    %1473 = vmatpush1.bf16.msra.mxu0 %v571
    %1474 = vmatprep.subr.bf16.mxu0 %v569
    %1475 = vmatpush1.bf16.msra.mxu0 %v568
    %1476 = vmatprep.subr.bf16.mxu0 %v566
    %1477 = vmatpush1.bf16.msra.mxu0 %v565
    %1478 = vmatprep.subr.bf16.mxu0 0
    %1479 = vmatpush2.bf16.msra.mxu0 0
    %1480 = vmatprep.subr.bf16.mxu0 0
    %1481 = vmatpush2.bf16.msra.mxu0 0
    %1482 = vmatprep.subr.bf16.mxu0 0
    %1483 = vmatpush2.bf16.msra.mxu0 0
    %1484 = vmatprep.subr.bf16.mxu0 0
    %1485 = vmatpush2.bf16.msra.mxu0 0
    %1486 = vmatprep.subr.bf16.mxu0 0
    %1487 = vmatpush2.bf16.msra.mxu0 0
    %1488 = vmatprep.subr.bf16.mxu0 0
    %1489 = vmatpush2.bf16.msra.mxu0 0
    %1490 = vmatprep.subr.bf16.mxu0 0
    %1491 = vmatpush2.bf16.msra.mxu0 0
    %1492 = vmatprep.subr.bf16.mxu0 0
    %1493 = vmatpush2.bf16.msra.mxu0 0
    %1494 = vmatprep.mubr.bf16.mxu0 0
    %1495 = vmatmul.mubr.bf16.gmra.mxu0 %v1461
    %v1496 = vpop.f32.mrf.mxu0
    %v1497 = vadd.f32 0.0, %v1496
    %v1498 = vpop.f32.mrf.mxu0
    %v1499 = vadd.f32 0.0, %v1498
    %v1500 = vpop.f32.mrf.mxu0
    %v1501 = vpop.f32.mrf.mxu0
    %1502 = vdwg.mxu0
    %1503 = vmatprep.subr.bf16.mxu0 0
    %1504 = vmatpush1.bf16.msra.mxu0 %v588
    %1505 = vmatprep.subr.bf16.mxu0 0
    %1506 = vmatpush1.bf16.msra.mxu0 %v585
    %1507 = vmatprep.subr.bf16.mxu0 0
    %1508 = vmatpush1.bf16.msra.mxu0 %v582
    %1509 = vmatprep.subr.bf16.mxu0 0
    %1510 = vmatpush1.bf16.msra.mxu0 %v579
    %1511 = vmatprep.subr.bf16.mxu0 0
    %1512 = vmatpush1.bf16.msra.mxu0 %v576
    %1513 = vmatprep.subr.bf16.mxu0 0
    %1514 = vmatpush1.bf16.msra.mxu0 %v573
    %1515 = vmatprep.subr.bf16.mxu0 0
    %1516 = vmatpush1.bf16.msra.mxu0 %v570
    %1517 = vmatprep.subr.bf16.mxu0 0
    %1518 = vmatpush1.bf16.msra.mxu0 %v567
    %1519 = vmatprep.subr.bf16.mxu0 0
    %1520 = vmatpush2.bf16.msra.mxu0 0
    %1521 = vmatprep.subr.bf16.mxu0 0
    %1522 = vmatpush2.bf16.msra.mxu0 0
    %1523 = vmatprep.subr.bf16.mxu0 0
    %1524 = vmatpush2.bf16.msra.mxu0 0
    %1525 = vmatprep.subr.bf16.mxu0 0
    %1526 = vmatpush2.bf16.msra.mxu0 0
    %1527 = vmatprep.subr.bf16.mxu0 0
    %1528 = vmatpush2.bf16.msra.mxu0 0
    %1529 = vmatprep.subr.bf16.mxu0 0
    %1530 = vmatpush2.bf16.msra.mxu0 0
    %1531 = vmatprep.subr.bf16.mxu0 0
    %1532 = vmatpush2.bf16.msra.mxu0 0
    %1533 = vmatprep.subr.bf16.mxu0 0
    %1534 = vmatpush2.bf16.msra.mxu0 0
    %1535 = vmatprep.mubr.bf16.mxu0 0
    %1536 = vmatmul.mubr.bf16.gmra.mxu0 %v1461
    %v1537 = vpop.f32.mrf.mxu0
    %v1538 = vadd.f32 0.0, %v1537
    %v1539 = vpop.f32.mrf.mxu0
    %v1540 = vpop.f32.mrf.mxu0
    %v1541 = vpop.f32.mrf.mxu0
    %1542 = vdwg.mxu0
    %s1543 = scalar_lea.vmem [#allocation2], 84
    %v1544 = vld [vmem:[%s1543] sm:$0xff]
    %v1545 = vld [vmem:[%s1543 + $0x8] sm:$0xf]
    %v1546 = vunpack.c.l.bf16 %v1544
    %v1547 = vunpack.c.h.bf16 %v1544
    %v1548 = vunpack.c.l.bf16 %v1545
    %v1549 = vadd.f32 %v1546, %v1497
    %v1550 = vxor.u32 %v1549, 2147483648
    %v1551 = vmul.f32 %v1550, 1.442695
    %v1552 = vpow.pop %v1551
    %v1553 = vadd.f32 %v1552, 1.0
    %v1554 = vrcp.pop %v1553
    %v1555 = vmul.f32 1.0, %v1554
    %v1556 = vadd.f32 %v1547, %v1499
    %v1557 = vxor.u32 %v1556, 2147483648
    %v1558 = vmul.f32 %v1557, 1.442695
    %v1559 = vpow.pop %v1558
    %v1560 = vadd.f32 %v1559, 1.0
    %v1561 = vrcp.pop %v1560
    %v1562 = vmul.f32 1.0, %v1561
    %v1563 = vadd.f32 %v1538, %v717
    %v1564 = vmul.f32 %v1555, %v1563
    %v1565 = vadd.f32 %v1548, %v1564
    %v1566 = vtanh.pop %v1565
    %v1567 = vsub.f32 1.0, %v1562
    %v1568 = vmul.f32 %v1567, %v1566
    %v1569 = vmul.f32 %v1562, %v1455
    %v1570 = vadd.f32 %v1568, %v1569
    %v1571 = vsel %vm1460, 1, 0
    %1572 = vset.pattern.permute.xlu0 0
    %1573 = vperm.xlu0 %1572, %v1571
    %v1574 = vpop.permute.xlu0 %1573
    %vm1575 = vcmp.eq.s32.totalorder %v1574, 1
    %v1576 = vsel %vm1575, %v1570, %v1455
    %v1577 = vsel %vm1575, %v1570, 0.0
    %v1578 = vpack.c.bf16 %v1577, %v1577
    %s1579 = scalar_lea.vmem [#allocation3], 28
    %1580 = vst [vmem:[%s1579] sm:$0xf] %v1578
    %v1581 = vld [vmem:[#allocation3] sm:$0xf]
    %v1582 = vld [vmem:[#allocation3 + $0x4] sm:$0xf]
    %v1583 = vld [vmem:[#allocation3 + $0x8] sm:$0xf]
    %v1584 = vld [vmem:[#allocation3 + $0xc] sm:$0xf]
    %v1585 = vld [vmem:[#allocation3 + $0x10] sm:$0xf]
    %v1586 = vld [vmem:[#allocation3 + $0x14] sm:$0xf]
    %v1587 = vld [vmem:[#allocation3 + $0x18] sm:$0xf]
    %v1588 = vld [vmem:[#allocation3 + $0x1c] sm:$0xf]
    %v1589 = vunpack.c.l.bf16 %v1581
    %v1590 = vunpack.c.l.bf16 %v1582
    %v1591 = vunpack.c.l.bf16 %v1583
    %v1592 = vunpack.c.l.bf16 %v1584
    %v1593 = vunpack.c.l.bf16 %v1585
    %v1594 = vunpack.c.l.bf16 %v1586
    %v1595 = vunpack.c.l.bf16 %v1587
    %v1596 = vunpack.c.l.bf16 %v1588
    %v1597 = vpack.c.bf16 %v1576, %v1576
    %v1598 = vld [vmem:[#allocation10] sm:$0xf]
    %v1599 = vld [vmem:[#allocation10 + $0x4] sm:$0xf]
    %v1600 = vld [vmem:[#allocation10 + $0x8] sm:$0xf]
    %v1601 = vld [vmem:[#allocation10 + $0xc] sm:$0xf]
    %v1602 = vld [vmem:[#allocation10 + $0x10] sm:$0xf]
    %v1603 = vld [vmem:[#allocation10 + $0x14] sm:$0xf]
    %v1604 = vld [vmem:[#allocation10 + $0x18] sm:$0xf]
    %v1605 = vld [vmem:[#allocation10 + $0x1c] sm:$0xf]
    %v1606 = vld [vmem:[#allocation10 + $0x20] sm:$0xf]
    %v1607 = vld [vmem:[#allocation10 + $0x24] sm:$0xf]
    %v1608 = vld [vmem:[#allocation10 + $0x28] sm:$0xf]
    %v1609 = vld [vmem:[#allocation10 + $0x2c] sm:$0xf]
    %v1610 = vld [vmem:[#allocation10 + $0x30] sm:$0xf]
    %v1611 = vld [vmem:[#allocation10 + $0x34] sm:$0xf]
    %v1612 = vld [vmem:[#allocation10 + $0x38] sm:$0xf]
    %v1613 = vld [vmem:[#allocation10 + $0x3c] sm:$0xf]
    %v1630 = vunpack.c.l.b16 %v1598
    %v1631 = vunpack.c.l.b16 %v1599
    %v1632 = vunpack.c.l.b16 %v1600
    %v1633 = vunpack.c.l.b16 %v1601
    %v1634 = vunpack.c.l.b16 %v1602
    %v1635 = vunpack.c.l.b16 %v1603
    %v1636 = vunpack.c.l.b16 %v1604
    %v1637 = vunpack.c.l.b16 %v1605
    %v1638 = vunpack.c.l.b16 %v1606
    %v1639 = vunpack.c.l.b16 %v1607
    %v1640 = vunpack.c.l.b16 %v1608
    %v1641 = vunpack.c.l.b16 %v1609
    %v1642 = vunpack.c.l.b16 %v1610
    %v1643 = vunpack.c.l.b16 %v1611
    %v1644 = vunpack.c.l.b16 %v1612
    %v1645 = vunpack.c.l.b16 %v1613
    %v1646 = vpack.c.b16 %v1631, %v1630
    %v1647 = vpack.c.b16 %v1633, %v1632
    %v1648 = vpack.c.b16 %v1635, %v1634
    %v1649 = vpack.c.b16 %v1637, %v1636
    %v1650 = vpack.c.b16 %v1639, %v1638
    %v1651 = vpack.c.b16 %v1641, %v1640
    %v1652 = vpack.c.b16 %v1643, %v1642
    %v1653 = vpack.c.b16 %v1645, %v1644
    %1662 = vmatprep.subr.bf16.mxu0 0
    %1663 = vmatpush1.bf16.msra.mxu0 %v1653
    %1664 = vmatprep.subr.bf16.mxu0 0
    %1665 = vmatpush1.bf16.msra.mxu0 %v1652
    %1666 = vmatprep.subr.bf16.mxu0 0
    %1667 = vmatpush1.bf16.msra.mxu0 %v1651
    %1668 = vmatprep.subr.bf16.mxu0 0
    %1669 = vmatpush1.bf16.msra.mxu0 %v1650
    %1670 = vmatprep.subr.bf16.mxu0 0
    %1671 = vmatpush1.bf16.msra.mxu0 %v1649
    %1672 = vmatprep.subr.bf16.mxu0 0
    %1673 = vmatpush1.bf16.msra.mxu0 %v1648
    %1674 = vmatprep.subr.bf16.mxu0 0
    %1675 = vmatpush1.bf16.msra.mxu0 %v1647
    %1676 = vmatprep.subr.bf16.mxu0 0
    %1677 = vmatpush1.bf16.msra.mxu0 %v1646
    %1678 = vmatprep.subr.bf16.mxu0 0
    %1679 = vmatpush2.bf16.msra.mxu0 0
    %1680 = vmatprep.subr.bf16.mxu0 0
    %1681 = vmatpush2.bf16.msra.mxu0 0
    %1682 = vmatprep.subr.bf16.mxu0 0
    %1683 = vmatpush2.bf16.msra.mxu0 0
    %1684 = vmatprep.subr.bf16.mxu0 0
    %1685 = vmatpush2.bf16.msra.mxu0 0
    %1686 = vmatprep.subr.bf16.mxu0 0
    %1687 = vmatpush2.bf16.msra.mxu0 0
    %1688 = vmatprep.subr.bf16.mxu0 0
    %1689 = vmatpush2.bf16.msra.mxu0 0
    %1690 = vmatprep.subr.bf16.mxu0 0
    %1691 = vmatpush2.bf16.msra.mxu0 0
    %1692 = vmatprep.subr.bf16.mxu0 0
    %1693 = vmatpush2.bf16.msra.mxu0 0
    %1694 = vmatprep.mubr.bf16.mxu0 0
    %1695 = vmatmul.mubr.bf16.gmra.mxu0 %v1597
    %v1696 = vpop.f32.mrf.mxu0
    %v1697 = vadd.f32 0.0, %v1696
    %v1698 = vpop.f32.mrf.mxu0
    %v1699 = vpop.f32.mrf.mxu0
    %v1700 = vpop.f32.mrf.mxu0
    %1701 = vdwg.mxu0
    %v1702 = vmul.f32 %v1589, %v1697
    %v1703 = vmul.f32 %v1590, %v1697
    %v1704 = vmul.f32 %v1591, %v1697
    %v1705 = vmul.f32 %v1592, %v1697
    %v1706 = vmul.f32 %v1593, %v1697
    %v1707 = vmul.f32 %v1594, %v1697
    %v1708 = vmul.f32 %v1595, %v1697
    %v1709 = vmul.f32 %v1596, %v1697
    %1710 = vadd.xlane.f32.xlu0 %v1702
    %v1711 = vpop.xlane.xlu0 %1710
    %1712 = vadd.xlane.f32.xlu0 %v1703
    %v1713 = vpop.xlane.xlu0 %1712
    %1714 = vadd.xlane.f32.xlu0 %v1704
    %v1715 = vpop.xlane.xlu0 %1714
    %1716 = vadd.xlane.f32.xlu0 %v1705
    %v1717 = vpop.xlane.xlu0 %1716
    %1718 = vadd.xlane.f32.xlu0 %v1706
    %v1719 = vpop.xlane.xlu0 %1718
    %1720 = vadd.xlane.f32.xlu0 %v1707
    %v1721 = vpop.xlane.xlu0 %1720
    %1722 = vadd.xlane.f32.xlu0 %v1708
    %v1723 = vpop.xlane.xlu0 %1722
    %1724 = vadd.xlane.f32.xlu0 %v1709
    %v1725 = vpop.xlane.xlu0 %1724
    %v1726 = vlaneseq
    %v1727 = vshrl.u32 %v1726, 7
    %v1728 = vld [vmem:[%s2] sm:$0x1]
    %v1729 = vlaneseq
    %v1730 = vshrl.u32 %v1729, 7
    %v1731 = vsub.s32 0, %v1730
    %v1732 = vrot.slane %v1728, %v1731
    %vm1733 = vcmp.lt.s32.totalorder %v1727, %v1732
    %v1742 = vlaneseq
    %v1743 = vand.u32 %v1742, 127
    %v1744 = vlaneseq
    %v1745 = vshrl.u32 %v1744, 7
    %v1746 = vsub.s32 %v1743, %v1745
    %v1747 = vrot.slane %v1711, %v1746
    %v1748 = vlaneseq
    %v1749 = vshrl.u32 %v1748, 7
    %v1750 = vsub.s32 %v1743, %v1749
    %v1751 = vrot.slane %v1713, %v1750
    %v1752 = vlaneseq
    %v1753 = vshrl.u32 %v1752, 7
    %v1754 = vsub.s32 %v1743, %v1753
    %v1755 = vrot.slane %v1715, %v1754
    %v1756 = vlaneseq
    %v1757 = vshrl.u32 %v1756, 7
    %v1758 = vsub.s32 %v1743, %v1757
    %v1759 = vrot.slane %v1717, %v1758
    %v1760 = vlaneseq
    %v1761 = vshrl.u32 %v1760, 7
    %v1762 = vsub.s32 %v1743, %v1761
    %v1763 = vrot.slane %v1719, %v1762
    %v1764 = vlaneseq
    %v1765 = vshrl.u32 %v1764, 7
    %v1766 = vsub.s32 %v1743, %v1765
    %v1767 = vrot.slane %v1721, %v1766
    %v1768 = vlaneseq
    %v1769 = vshrl.u32 %v1768, 7
    %v1770 = vsub.s32 %v1743, %v1769
    %v1771 = vrot.slane %v1723, %v1770
    %v1772 = vlaneseq
    %v1773 = vshrl.u32 %v1772, 7
    %v1774 = vsub.s32 %v1743, %v1773
    %v1775 = vrot.slane %v1725, %v1774
    %vm1776 = vcmask 1041409
    %v1777 = vsel %vm1776, %v1751, %v1747
    %vm1778 = vcmask 1042434
    %v1779 = vsel %vm1778, %v1755, %v1777
    %vm1780 = vcmask 1043459
    %v1781 = vsel %vm1780, %v1759, %v1779
    %vm1782 = vcmask 1044484
    %v1783 = vsel %vm1782, %v1763, %v1781
    %vm1784 = vcmask 1045509
    %v1785 = vsel %vm1784, %v1767, %v1783
    %vm1786 = vcmask 1046534
    %v1787 = vsel %vm1786, %v1771, %v1785
    %vm1788 = vcmask 1047559
    %v1789 = vsel %vm1788, %v1775, %v1787
    %v1791 = vsel %vm1733, %v1789, -1e+30
    %vm1792 = vcmask 64512
    %v1793 = vsel %vm1792, %v1791, -inf
    %v1794 = vrot.slane %v1793, 4
    %v1795 = vmax.f32 %v1793, %v1794
    %v1796 = vrot.slane %v1795, 2
    %v1797 = vmax.f32 %v1795, %v1796
    %v1798 = vrot.slane %v1797, 1
    %v1799 = vmax.f32 %v1797, %v1798
    %v1800 = vsub.f32 %v1791, %v1799
    %v1801 = vmul.f32 %v1800, 1.442695
    %v1802 = vpow.pop %v1801
    %v1803 = vsel %vm1792, %v1802, 0.0
    %v1804 = vrot.slane %v1803, 4
    %v1805 = vadd.f32 %v1803, %v1804
    %v1806 = vrot.slane %v1805, 2
    %v1807 = vadd.f32 %v1805, %v1806
    %v1808 = vrot.slane %v1807, 1
    %v1809 = vadd.f32 %v1807, %v1808
    %v1810 = vrcp.pop %v1809
    %v1811 = vmul.f32 %v1802, %v1810
    %v1812 = vlaneseq
    %v1813 = vshrl.u32 %v1812, 7
    %v1814 = vsub.s32 0, %v1813
    %v1815 = vrot.slane %v1811, %v1814
    %1817 = vbcast.lane.b32.xlu0 %v1815, 256
    %v1818 = vpop.permute.xlu0 %1817
    %v1819 = vlaneseq
    %v1820 = vshrl.u32 %v1819, 7
    %v1821 = vsub.s32 1, %v1820
    %v1822 = vrot.slane %v1811, %v1821
    %1824 = vbcast.lane.b32.xlu0 %v1822, 256
    %v1825 = vpop.permute.xlu0 %1824
    %v1826 = vlaneseq
    %v1827 = vshrl.u32 %v1826, 7
    %v1828 = vsub.s32 2, %v1827
    %v1829 = vrot.slane %v1811, %v1828
    %1831 = vbcast.lane.b32.xlu0 %v1829, 256
    %v1832 = vpop.permute.xlu0 %1831
    %v1833 = vlaneseq
    %v1834 = vshrl.u32 %v1833, 7
    %v1835 = vsub.s32 3, %v1834
    %v1836 = vrot.slane %v1811, %v1835
    %1838 = vbcast.lane.b32.xlu0 %v1836, 256
    %v1839 = vpop.permute.xlu0 %1838
    %v1840 = vlaneseq
    %v1841 = vshrl.u32 %v1840, 7
    %v1842 = vsub.s32 4, %v1841
    %v1843 = vrot.slane %v1811, %v1842
    %1845 = vbcast.lane.b32.xlu0 %v1843, 256
    %v1846 = vpop.permute.xlu0 %1845
    %v1847 = vlaneseq
    %v1848 = vshrl.u32 %v1847, 7
    %v1849 = vsub.s32 5, %v1848
    %v1850 = vrot.slane %v1811, %v1849
    %1852 = vbcast.lane.b32.xlu0 %v1850, 256
    %v1853 = vpop.permute.xlu0 %1852
    %v1854 = vlaneseq
    %v1855 = vshrl.u32 %v1854, 7
    %v1856 = vsub.s32 6, %v1855
    %v1857 = vrot.slane %v1811, %v1856
    %1859 = vbcast.lane.b32.xlu0 %v1857, 256
    %v1860 = vpop.permute.xlu0 %1859
    %v1861 = vlaneseq
    %v1862 = vshrl.u32 %v1861, 7
    %v1863 = vsub.s32 7, %v1862
    %v1864 = vrot.slane %v1811, %v1863
    %1866 = vbcast.lane.b32.xlu0 %v1864, 256
    %v1867 = vpop.permute.xlu0 %1866
    %v1868 = vmul.f32 %v1818, %v1589
    %v1869 = vmul.f32 %v1825, %v1590
    %v1870 = vmul.f32 %v1832, %v1591
    %v1871 = vmul.f32 %v1839, %v1592
    %v1872 = vmul.f32 %v1846, %v1593
    %v1873 = vmul.f32 %v1853, %v1594
    %v1874 = vmul.f32 %v1860, %v1595
    %v1875 = vmul.f32 %v1867, %v1596
    %v1876 = vadd.f32 %v1868, %v1869
    %v1877 = vadd.f32 %v1876, %v1870
    %v1878 = vadd.f32 %v1877, %v1871
    %v1879 = vadd.f32 %v1878, %v1872
    %v1880 = vadd.f32 %v1879, %v1873
    %v1881 = vadd.f32 %v1880, %v1874
    %v1882 = vadd.f32 %v1881, %v1875
    %v1883 = vpack.c.bf16 %v1882, %v1882
    %v1884 = vld [vmem:[#allocation12] sm:$0xf]
    %v1885 = vld [vmem:[#allocation12 + $0x4] sm:$0xf]
    %v1886 = vld [vmem:[#allocation12 + $0x8] sm:$0xf]
    %v1887 = vld [vmem:[#allocation12 + $0xc] sm:$0xf]
    %v1888 = vld [vmem:[#allocation12 + $0x10] sm:$0xf]
    %v1889 = vld [vmem:[#allocation12 + $0x14] sm:$0xf]
    %v1890 = vld [vmem:[#allocation12 + $0x18] sm:$0xf]
    %v1891 = vld [vmem:[#allocation12 + $0x1c] sm:$0xf]
    %v1892 = vld [vmem:[#allocation12 + $0x20] sm:$0xf]
    %v1893 = vld [vmem:[#allocation12 + $0x24] sm:$0xf]
    %v1894 = vld [vmem:[#allocation12 + $0x28] sm:$0xf]
    %v1895 = vld [vmem:[#allocation12 + $0x2c] sm:$0xf]
    %v1896 = vld [vmem:[#allocation12 + $0x30] sm:$0xf]
    %v1897 = vld [vmem:[#allocation12 + $0x34] sm:$0xf]
    %v1898 = vld [vmem:[#allocation12 + $0x38] sm:$0xf]
    %v1899 = vld [vmem:[#allocation12 + $0x3c] sm:$0xf]
    %v1900 = vld [vmem:[#allocation13] sm:$0xf]
    %v1901 = vld [vmem:[#allocation13 + $0x4] sm:$0xf]
    %v1902 = vld [vmem:[#allocation13 + $0x8] sm:$0xf]
    %v1903 = vld [vmem:[#allocation13 + $0xc] sm:$0xf]
    %v1904 = vld [vmem:[#allocation13 + $0x10] sm:$0xf]
    %v1905 = vld [vmem:[#allocation13 + $0x14] sm:$0xf]
    %v1906 = vld [vmem:[#allocation13 + $0x18] sm:$0xf]
    %v1907 = vld [vmem:[#allocation13 + $0x1c] sm:$0xf]
    %v1908 = vld [vmem:[#allocation13 + $0x20] sm:$0xf]
    %v1909 = vld [vmem:[#allocation13 + $0x24] sm:$0xf]
    %v1910 = vld [vmem:[#allocation13 + $0x28] sm:$0xf]
    %v1911 = vld [vmem:[#allocation13 + $0x2c] sm:$0xf]
    %v1912 = vld [vmem:[#allocation13 + $0x30] sm:$0xf]
    %v1913 = vld [vmem:[#allocation13 + $0x34] sm:$0xf]
    %v1914 = vld [vmem:[#allocation13 + $0x38] sm:$0xf]
    %v1915 = vld [vmem:[#allocation13 + $0x3c] sm:$0xf]
    %v1932 = vunpack.c.l.b16 %v1900
    %v1933 = vunpack.c.l.b16 %v1901
    %v1934 = vunpack.c.l.b16 %v1902
    %v1935 = vunpack.c.l.b16 %v1903
    %v1936 = vunpack.c.l.b16 %v1904
    %v1937 = vunpack.c.l.b16 %v1905
    %v1938 = vunpack.c.l.b16 %v1906
    %v1939 = vunpack.c.l.b16 %v1907
    %v1940 = vunpack.c.l.b16 %v1908
    %v1941 = vunpack.c.l.b16 %v1909
    %v1942 = vunpack.c.l.b16 %v1910
    %v1943 = vunpack.c.l.b16 %v1911
    %v1944 = vunpack.c.l.b16 %v1912
    %v1945 = vunpack.c.l.b16 %v1913
    %v1946 = vunpack.c.l.b16 %v1914
    %v1947 = vunpack.c.l.b16 %v1915
    %v1948 = vpack.c.b16 %v1933, %v1932
    %v1949 = vpack.c.b16 %v1935, %v1934
    %v1950 = vpack.c.b16 %v1937, %v1936
    %v1951 = vpack.c.b16 %v1939, %v1938
    %v1952 = vpack.c.b16 %v1941, %v1940
    %v1953 = vpack.c.b16 %v1943, %v1942
    %v1954 = vpack.c.b16 %v1945, %v1944
    %v1955 = vpack.c.b16 %v1947, %v1946
    %1964 = vmatprep.subr.bf16.mxu0 0
    %1965 = vmatpush1.bf16.msra.mxu0 %v1955
    %1966 = vmatprep.subr.bf16.mxu0 0
    %1967 = vmatpush1.bf16.msra.mxu0 %v1954
    %1968 = vmatprep.subr.bf16.mxu0 0
    %1969 = vmatpush1.bf16.msra.mxu0 %v1953
    %1970 = vmatprep.subr.bf16.mxu0 0
    %1971 = vmatpush1.bf16.msra.mxu0 %v1952
    %1972 = vmatprep.subr.bf16.mxu0 0
    %1973 = vmatpush1.bf16.msra.mxu0 %v1951
    %1974 = vmatprep.subr.bf16.mxu0 0
    %1975 = vmatpush1.bf16.msra.mxu0 %v1950
    %1976 = vmatprep.subr.bf16.mxu0 0
    %1977 = vmatpush1.bf16.msra.mxu0 %v1949
    %1978 = vmatprep.subr.bf16.mxu0 0
    %1979 = vmatpush1.bf16.msra.mxu0 %v1948
    %1980 = vmatprep.subr.bf16.mxu0 0
    %1981 = vmatpush2.bf16.msra.mxu0 0
    %1982 = vmatprep.subr.bf16.mxu0 0
    %1983 = vmatpush2.bf16.msra.mxu0 0
    %1984 = vmatprep.subr.bf16.mxu0 0
    %1985 = vmatpush2.bf16.msra.mxu0 0
    %1986 = vmatprep.subr.bf16.mxu0 0
    %1987 = vmatpush2.bf16.msra.mxu0 0
    %1988 = vmatprep.subr.bf16.mxu0 0
    %1989 = vmatpush2.bf16.msra.mxu0 0
    %1990 = vmatprep.subr.bf16.mxu0 0
    %1991 = vmatpush2.bf16.msra.mxu0 0
    %1992 = vmatprep.subr.bf16.mxu0 0
    %1993 = vmatpush2.bf16.msra.mxu0 0
    %1994 = vmatprep.subr.bf16.mxu0 0
    %1995 = vmatpush2.bf16.msra.mxu0 0
    %1996 = vmatprep.mubr.bf16.mxu0 0
    %1997 = vmatmul.mubr.bf16.gmra.mxu0 %v1597
    %v1998 = vpop.f32.mrf.mxu0
    %v1999 = vadd.f32 0.0, %v1998
    %v2000 = vpop.f32.mrf.mxu0
    %v2001 = vpop.f32.mrf.mxu0
    %v2002 = vpop.f32.mrf.mxu0
    %2003 = vdwg.mxu0
    %v2020 = vunpack.c.l.b16 %v1884
    %v2021 = vunpack.c.l.b16 %v1885
    %v2022 = vunpack.c.l.b16 %v1886
    %v2023 = vunpack.c.l.b16 %v1887
    %v2024 = vunpack.c.l.b16 %v1888
    %v2025 = vunpack.c.l.b16 %v1889
    %v2026 = vunpack.c.l.b16 %v1890
    %v2027 = vunpack.c.l.b16 %v1891
    %v2028 = vunpack.c.l.b16 %v1892
    %v2029 = vunpack.c.l.b16 %v1893
    %v2030 = vunpack.c.l.b16 %v1894
    %v2031 = vunpack.c.l.b16 %v1895
    %v2032 = vunpack.c.l.b16 %v1896
    %v2033 = vunpack.c.l.b16 %v1897
    %v2034 = vunpack.c.l.b16 %v1898
    %v2035 = vunpack.c.l.b16 %v1899
    %v2036 = vpack.c.b16 %v2021, %v2020
    %v2037 = vpack.c.b16 %v2023, %v2022
    %v2038 = vpack.c.b16 %v2025, %v2024
    %v2039 = vpack.c.b16 %v2027, %v2026
    %v2040 = vpack.c.b16 %v2029, %v2028
    %v2041 = vpack.c.b16 %v2031, %v2030
    %v2042 = vpack.c.b16 %v2033, %v2032
    %v2043 = vpack.c.b16 %v2035, %v2034
    %2052 = vmatprep.subr.bf16.mxu0 0
    %2053 = vmatpush1.bf16.msra.mxu0 %v2043
    %2054 = vmatprep.subr.bf16.mxu0 0
    %2055 = vmatpush1.bf16.msra.mxu0 %v2042
    %2056 = vmatprep.subr.bf16.mxu0 0
    %2057 = vmatpush1.bf16.msra.mxu0 %v2041
    %2058 = vmatprep.subr.bf16.mxu0 0
    %2059 = vmatpush1.bf16.msra.mxu0 %v2040
    %2060 = vmatprep.subr.bf16.mxu0 0
    %2061 = vmatpush1.bf16.msra.mxu0 %v2039
    %2062 = vmatprep.subr.bf16.mxu0 0
    %2063 = vmatpush1.bf16.msra.mxu0 %v2038
    %2064 = vmatprep.subr.bf16.mxu0 0
    %2065 = vmatpush1.bf16.msra.mxu0 %v2037
    %2066 = vmatprep.subr.bf16.mxu0 0
    %2067 = vmatpush1.bf16.msra.mxu0 %v2036
    %2068 = vmatprep.subr.bf16.mxu0 0
    %2069 = vmatpush2.bf16.msra.mxu0 0
    %2070 = vmatprep.subr.bf16.mxu0 0
    %2071 = vmatpush2.bf16.msra.mxu0 0
    %2072 = vmatprep.subr.bf16.mxu0 0
    %2073 = vmatpush2.bf16.msra.mxu0 0
    %2074 = vmatprep.subr.bf16.mxu0 0
    %2075 = vmatpush2.bf16.msra.mxu0 0
    %2076 = vmatprep.subr.bf16.mxu0 0
    %2077 = vmatpush2.bf16.msra.mxu0 0
    %2078 = vmatprep.subr.bf16.mxu0 0
    %2079 = vmatpush2.bf16.msra.mxu0 0
    %2080 = vmatprep.subr.bf16.mxu0 0
    %2081 = vmatpush2.bf16.msra.mxu0 0
    %2082 = vmatprep.subr.bf16.mxu0 0
    %2083 = vmatpush2.bf16.msra.mxu0 0
    %2084 = vmatprep.mubr.bf16.mxu0 0
    %2085 = vmatmul.mubr.bf16.gmra.mxu0 %v1883
    %v2086 = vpop.f32.mrf.mxu0
    %v2087 = vadd.f32 %v1999, %v2086
    %v2088 = vpop.f32.mrf.mxu0
    %v2089 = vpop.f32.mrf.mxu0
    %v2090 = vpop.f32.mrf.mxu0
    %2091 = vdwg.mxu0
    %v2092 = vtanh.pop %v2087
    %v2093 = vpack.c.bf16 %v2092, %v2092
    %v2094 = vld [vmem:[#allocation15] sm:$0xf]
    %v2095 = vld [vmem:[#allocation15 + $0x4] sm:$0xf]
    %v2096 = vld [vmem:[#allocation15 + $0x8] sm:$0xf]
    %v2097 = vld [vmem:[#allocation15 + $0xc] sm:$0xf]
    %v2098 = vld [vmem:[#allocation15 + $0x10] sm:$0xf]
    %v2099 = vld [vmem:[#allocation15 + $0x14] sm:$0xf]
    %v2100 = vld [vmem:[#allocation15 + $0x18] sm:$0xf]
    %v2101 = vld [vmem:[#allocation15 + $0x1c] sm:$0xf]
    %v2102 = vld [vmem:[#allocation15 + $0x20] sm:$0xf]
    %v2103 = vld [vmem:[#allocation15 + $0x24] sm:$0xf]
    %v2104 = vld [vmem:[#allocation15 + $0x28] sm:$0xf]
    %v2105 = vld [vmem:[#allocation15 + $0x2c] sm:$0xf]
    %v2106 = vld [vmem:[#allocation15 + $0x30] sm:$0xf]
    %v2107 = vld [vmem:[#allocation15 + $0x34] sm:$0xf]
    %v2108 = vld [vmem:[#allocation15 + $0x38] sm:$0xf]
    %v2109 = vld [vmem:[#allocation15 + $0x3c] sm:$0xf]
    %v2110 = vld [vmem:[%s11] sm:$0x1]
    %v2112 = vlaneseq
    %v2113 = vshrl.u32 %v2112, 7
    %v2114 = vsub.s32 0, %v2113
    %v2115 = vrot.slane %v2110, %v2114
    %v2133 = vunpack.c.l.b16 %v2094
    %v2134 = vunpack.c.l.b16 %v2095
    %v2135 = vunpack.c.l.b16 %v2096
    %v2136 = vunpack.c.l.b16 %v2097
    %v2137 = vunpack.c.l.b16 %v2098
    %v2138 = vunpack.c.l.b16 %v2099
    %v2139 = vunpack.c.l.b16 %v2100
    %v2140 = vunpack.c.l.b16 %v2101
    %v2141 = vunpack.c.l.b16 %v2102
    %v2142 = vunpack.c.l.b16 %v2103
    %v2143 = vunpack.c.l.b16 %v2104
    %v2144 = vunpack.c.l.b16 %v2105
    %v2145 = vunpack.c.l.b16 %v2106
    %v2146 = vunpack.c.l.b16 %v2107
    %v2147 = vunpack.c.l.b16 %v2108
    %v2148 = vunpack.c.l.b16 %v2109
    %v2149 = vpack.c.b16 %v2134, %v2133
    %v2150 = vpack.c.b16 %v2136, %v2135
    %v2151 = vpack.c.b16 %v2138, %v2137
    %v2152 = vpack.c.b16 %v2140, %v2139
    %v2153 = vpack.c.b16 %v2142, %v2141
    %v2154 = vpack.c.b16 %v2144, %v2143
    %v2155 = vpack.c.b16 %v2146, %v2145
    %v2156 = vpack.c.b16 %v2148, %v2147
    %2165 = vmatprep.subr.bf16.mxu0 0
    %2166 = vmatpush1.bf16.msra.mxu0 %v2156
    %2167 = vmatprep.subr.bf16.mxu0 0
    %2168 = vmatpush1.bf16.msra.mxu0 %v2155
    %2169 = vmatprep.subr.bf16.mxu0 0
    %2170 = vmatpush1.bf16.msra.mxu0 %v2154
    %2171 = vmatprep.subr.bf16.mxu0 0
    %2172 = vmatpush1.bf16.msra.mxu0 %v2153
    %2173 = vmatprep.subr.bf16.mxu0 0
    %2174 = vmatpush1.bf16.msra.mxu0 %v2152
    %2175 = vmatprep.subr.bf16.mxu0 0
    %2176 = vmatpush1.bf16.msra.mxu0 %v2151
    %2177 = vmatprep.subr.bf16.mxu0 0
    %2178 = vmatpush1.bf16.msra.mxu0 %v2150
    %2179 = vmatprep.subr.bf16.mxu0 0
    %2180 = vmatpush1.bf16.msra.mxu0 %v2149
    %2181 = vmatprep.subr.bf16.mxu0 0
    %2182 = vmatpush2.bf16.msra.mxu0 0
    %2183 = vmatprep.subr.bf16.mxu0 0
    %2184 = vmatpush2.bf16.msra.mxu0 0
    %2185 = vmatprep.subr.bf16.mxu0 0
    %2186 = vmatpush2.bf16.msra.mxu0 0
    %2187 = vmatprep.subr.bf16.mxu0 0
    %2188 = vmatpush2.bf16.msra.mxu0 0
    %2189 = vmatprep.subr.bf16.mxu0 0
    %2190 = vmatpush2.bf16.msra.mxu0 0
    %2191 = vmatprep.subr.bf16.mxu0 0
    %2192 = vmatpush2.bf16.msra.mxu0 0
    %2193 = vmatprep.subr.bf16.mxu0 0
    %2194 = vmatpush2.bf16.msra.mxu0 0
    %2195 = vmatprep.subr.bf16.mxu0 0
    %2196 = vmatpush2.bf16.msra.mxu0 0
    %2197 = vmatprep.mubr.bf16.mxu0 0
    %2198 = vmatmul.mubr.bf16.gmra.mxu0 %v2093
    %v2199 = vpop.f32.mrf.mxu0
    %v2200 = vadd.f32 %v2115, %v2199
    %v2201 = vpop.f32.mrf.mxu0
    %v2202 = vpop.f32.mrf.mxu0
    %v2203 = vpop.f32.mrf.mxu0
    %2204 = vdwg.mxu0
    %2205 = vmax.xlane.f32.xlu0 %v2200
    %v2206 = vpop.xlane.xlu0 %2205
    %v2207 = vsub.f32 %v2200, %v2206
    %v2208 = vmul.f32 %v2207, 1.442695
    %v2209 = vpow.pop %v2208
    %2210 = vadd.xlane.f32.xlu0 %v2209
    %v2211 = vpop.xlane.xlu0 %2210
    %v2212 = vlog2.pop %v2211
    %v2213 = vmul.f32 %v2212, 0.6931472
    %v2214 = vsub.f32 %v2207, %v2213
    %2215 = vst [vmem:[#allocation16] sm:$0xff] %v2214
    // Predicated region
    $region78: #{tpu_custom_call.1} parent=1 // pred_check
      _
    $region79: #{tpu_custom_call.1} parent=1 // pred_check_branch
      %2217 = sbr.rel (0) target = $region81
    $region80: #{tpu_custom_call.1} parent=1 // pred_region
      %s2219 = ssub.s32 128, 128
      %2220 = vsyncadd [#allocation6], %s2219
      %s2222 = sshll.u32 [#allocation16], 4
      %s2223 = int_to_ptr.vmem [resolvable:$true] %s2222
      %2225 = dma.vmem_to_hbm [thread:$0]  %s2223, 128, %s12, [#allocation6]
    $region81: #{tpu_custom_call.1} parent=1 // pred_fallthru
      _
    // Predicated region
    $region82: #{tpu_custom_call.1} parent=1 // pred_check
      _
    $region83: #{tpu_custom_call.1} parent=1 // pred_check_branch
      %2227 = sbr.rel (0) target = $region85
    $region84: #{tpu_custom_call.1} parent=1 // pred_region
      %2228 = dma.done [#allocation6], 128
    $region85: #{tpu_custom_call.1} parent=1 // pred_fallthru
      _
    %2229 = vsyncpa [#allocation5], 1
    %2230 = vsyncpa [#allocation8], 1
    %2231 = vsyncpa [#allocation11], 1
    %2232 = vsyncpa [#allocation14], 1
    %2233 = vsyncpa [#allocation6], 1

</llo_original>
